<compile_context>
chip_gen: v6e
topology: v6e:2x2x1
jax: 0.10.0
libtpu: 0.0.40
codegen_flags: <defaults>
</compile_context>

<pallas_src>
import jax
import jax.numpy as jnp
import numpy as np
from jax.experimental import pallas as pl
from jax.experimental.pallas import tpu as pltpu

EPS = 1e-5

# Lane layout of the packed per-image stats output (N, 1, 8) f32.
_S3, _S4, _T3, _T4, _SNLL, _TNLL = range(6)


# ---------------------------------------------------------------------------
# Fused kernel: AdaIN + chaos mixing + moments + _ImageDA NLL losses.
# ---------------------------------------------------------------------------
def _adain_chaos_kernel(src_ref, tgt_ref, w1_ref, w2d_ref,
                        fake_src_ref, fake_tgt_ref, stats_ref,
                        hs_ref, ht_ref):
    cj = pl.program_id(1)
    first = cj == 0
    last = cj == pl.num_programs(1) - 1

    src = src_ref[0].astype(jnp.float32)      # (C_BLK, HW_s)
    tgt = tgt_ref[0].astype(jnp.float32)      # (C_BLK, HW_t)

    def norm_stats(x):
        """Per-channel spatial mean / unbiased var / norm (full-HW block)."""
        hw = x.shape[-1]
        inv_n = 1.0 / hw
        inv_nm1 = 1.0 / (hw - 1) if hw > 1 else float("nan")  # torch.var ddof=1
        mean = jnp.sum(x, axis=-1, keepdims=True) * inv_n
        diff = x - mean
        var = jnp.sum(diff * diff, axis=-1, keepdims=True) * inv_nm1
        inv_std = 1.0 / jnp.sqrt(var + EPS)                    # (C_BLK, 1) only
        norm = diff * inv_std
        return mean, var, norm

    s_mean, s_var, s_norm = norm_stats(src)
    t_mean, t_var, t_norm = norm_stats(tgt)

    # "chaos" mixing — verbatim reference math: sqrt of the spatial *mean*
    # (not std) and adding the *variance*.  norm is reused, so each fake tensor
    # costs exactly one full-tile multiply + add (per-channel scalars folded).
    fake_src_ref[0] = (t_norm * jnp.sqrt(s_mean + EPS) + s_var).astype(fake_src_ref.dtype)
    fake_tgt_ref[0] = (s_norm * jnp.sqrt(t_mean + EPS) + t_var).astype(fake_tgt_ref.dtype)

    def pow_sums(norm):
        n2 = norm * norm
        p3 = jnp.sum(n2 * norm, axis=(0, 1), keepdims=True).reshape(1, 1, 1)
        p4 = jnp.sum(n2 * n2, axis=(0, 1), keepdims=True).reshape(1, 1, 1)
        return p3, p4

    s3, s4 = pow_sums(s_norm)
    t3, t4 = pow_sums(t_norm)

    # NOTE: when the C axis has a single block, `first` and `last` are both
    # true in the same invocation; init must stay in program order before the
    # accumulations and the finalize adds (covered by the n_cb == 1 test).
    @pl.when(first)
    def _init():
        stats_ref[...] = jnp.zeros_like(stats_ref)
        hs_ref[...] = jnp.zeros_like(hs_ref)
        ht_ref[...] = jnp.zeros_like(ht_ref)

    # Single packed per-image accumulator: one 8-lane RMW on the resident
    # output block per step instead of six tiny output pipelines.
    lane = jax.lax.broadcasted_iota(jnp.int32, stats_ref.shape, 2)   # (1, 1, 8)
    stats_ref[...] += (jnp.where(lane == _S3, s3, 0.0)
                       + jnp.where(lane == _S4, s4, 0.0)
                       + jnp.where(lane == _T3, t3, 0.0)
                       + jnp.where(lane == _T4, t4, 0.0))

    # Fused _ImageDA Conv1: h += W1 @ norm accumulated over C blocks (MXU).
    # bf16 operands + f32 accumulation => single-pass MXU on all generations.
    w1 = w1_ref[...].astype(jnp.bfloat16)                            # (HIDDEN, C_BLK)
    hs_ref[...] += jnp.dot(w1, s_norm.astype(jnp.bfloat16),
                           preferred_element_type=jnp.float32)
    ht_ref[...] += jnp.dot(w1, t_norm.astype(jnp.bfloat16),
                           preferred_element_type=jnp.float32)

    @pl.when(last)
    def _finalize():
        w2d = w2d_ref[...].astype(jnp.float32)    # (1, HIDDEN) = w2[1] - w2[0]

        def nll_sum(h, sign):
            h = jnp.maximum(h, 0.0)                                        # ReLU
            d = jnp.dot(w2d, h, preferred_element_type=jnp.float32)        # (1, HW)
            x = sign * d                                                   # NLL = softplus(x)
            sp = jnp.maximum(x, 0.0) + jnp.log1p(jnp.exp(-jnp.abs(x)))
            return jnp.sum(sp, axis=(0, 1), keepdims=True).reshape(1, 1, 1)

        # source label = 1: NLL = lse - s1 = softplus(-d)
        s_nll = nll_sum(hs_ref[...], -1.0)
        # target label = 0: NLL = lse - s0 = softplus(+d)
        t_nll = nll_sum(ht_ref[...], 1.0)
        stats_ref[...] += (jnp.where(lane == _SNLL, s_nll, 0.0)
                           + jnp.where(lane == _TNLL, t_nll, 0.0))


# ---------------------------------------------------------------------------
# Wrapper: generation-aware tiling / VMEM budgeting, final scalar reductions.
# ---------------------------------------------------------------------------
def _vmem_capacity_bytes():
    """Per-TensorCore VMEM capacity (v5e/v6e: 128 MiB, v7x: 64 MiB)."""
    try:
        cap = getattr(pltpu.get_tpu_info(), "vmem_capacity_bytes", None)
        if cap:
            return int(cap)
    except Exception:
        pass
    return 64 * 2**20          # conservative fallback (v7x per-core)


def _pick_c_block(C, per_channel_bytes, budget_bytes):
    # The w1 BlockSpec requires the channel block to be a multiple of 128 or
    # the full channel count; 128-multiples also keep the MXU K dim wide (v5e).
    candidates = [c for c in (512, 384, 256, 128) if C % c == 0]
    if not candidates:
        return C
    for c in candidates:
        if c * per_channel_bytes <= budget_bytes:
            return c
    return candidates[-1]      # 128 floor; HW-tiling (see TODO) beyond this


def adain_with_chaos(source_feat, target_feat, da_w1, da_w2, *, c_block=None):
    N, C, H, W = source_feat.shape
    _N, _C, _H, _W = target_feat.shape
    assert N == _N and C == _C, "chaos mixing broadcasts source stats onto target norm"
    hidden, c_in = da_w1.shape
    assert c_in == C and da_w2.shape == (2, hidden)

    hw_s, hw_t = H * W, _H * _W
    # No lane padding / output slicing: last block dim == full HW extent.
    src = source_feat.reshape(N, C, hw_s)
    tgt = target_feat.reshape(N, C, hw_t)

    # _ImageDA weights: Conv1 shipped as bf16 MXU operand; 2-class head
    # collapsed to the logit difference (avoids a lane-width-2 matmul).
    w1 = da_w1.astype(jnp.bfloat16)                                  # (HIDDEN, C)
    w2d = (da_w2[1] - da_w2[0]).reshape(1, hidden).astype(jnp.float32)

    out_dtype = jnp.promote_types(source_feat.dtype, target_feat.dtype)
    in_bytes = max(jnp.dtype(source_feat.dtype).itemsize,
                   jnp.dtype(target_feat.dtype).itemsize)
    out_bytes = jnp.dtype(out_dtype).itemsize

    capacity = _vmem_capacity_bytes()
    headroom = 8 * 2**20
    # Resident Conv1 accumulators: independent of c_block, scale with HW.
    scratch_bytes = hidden * (hw_s + hw_t) * 4

    if c_block is None:
        per_chan = ((hw_s + hw_t) * (in_bytes + out_bytes) * 2      # double-buffered I/O
                    + (hw_s + hw_t) * (4 + 2)                       # f32 working + bf16 copies
                    + hidden * 2 * 2)                               # w1 block (bf16, dbl-buffered)
        budget = capacity - headroom - scratch_bytes - (2 << 20)
        c_block = _pick_c_block(C, per_chan, budget)
    assert C % c_block == 0
    n_cb = C // c_block

    io_blk = (c_block * (hw_s + hw_t) * (in_bytes + out_bytes)
              + hidden * c_block * 2 + hidden * 4)
    tmp_blk = c_block * (hw_s + hw_t) * (4 + 2)
    vmem_need = 2 * io_blk + tmp_blk + scratch_bytes + (2 << 20)
    # Never request more than physical VMEM minus headroom (v7x: 64 MiB/core).
    vmem_limit = int(min(max(32 * 2**20, vmem_need), capacity - headroom))

    outs = pl.pallas_call(
        _adain_chaos_kernel,
        out_shape=(
            jax.ShapeDtypeStruct((N, C, hw_t), out_dtype),   # fake_source (target spatial)
            jax.ShapeDtypeStruct((N, C, hw_s), out_dtype),   # fake_target (source spatial)
            jax.ShapeDtypeStruct((N, 1, 8), jnp.float32),    # packed per-image stats
        ),
        grid_spec=pltpu.PrefetchScalarGridSpec(
            num_scalar_prefetch=0,
            grid=(N, n_cb),
            in_specs=[
                pl.BlockSpec((1, c_block, hw_s), lambda n, c: (n, c, 0)),
                pl.BlockSpec((1, c_block, hw_t), lambda n, c: (n, c, 0)),
                pl.BlockSpec((hidden, c_block), lambda n, c: (0, c)),
                pl.BlockSpec((1, hidden), lambda n, c: (0, 0)),
            ],
            out_specs=(
                pl.BlockSpec((1, c_block, hw_t), lambda n, c: (n, c, 0)),
                pl.BlockSpec((1, c_block, hw_s), lambda n, c: (n, c, 0)),
                pl.BlockSpec((1, 1, 8), lambda n, c: (n, 0, 0)),
            ),
            scratch_shapes=[
                pltpu.VMEM((hidden, hw_s), jnp.float32),     # h accumulator (source)
                pltpu.VMEM((hidden, hw_t), jnp.float32),     # h accumulator (target)
            ],
        ),
        compiler_params=pltpu.CompilerParams(
            dimension_semantics=("parallel", "arbitrary"),
            vmem_limit_bytes=vmem_limit,
        ),
    )(src, tgt, w1, w2d)

    fake_src_p, fake_tgt_p, stats = outs
    fake_source_feat = fake_src_p.reshape(N, C, _H, _W)
    fake_target_feat = fake_tgt_p.reshape(N, C, H, W)

    s3 = jnp.sum(stats[:, 0, _S3])
    s4 = jnp.sum(stats[:, 0, _S4])
    t3 = jnp.sum(stats[:, 0, _T3])
    t4 = jnp.sum(stats[:, 0, _T4])
    s_nll = jnp.sum(stats[:, 0, _SNLL])
    t_nll = jnp.sum(stats[:, 0, _TNLL])

    cnt_s = float(N * C * hw_s)
    cnt_t = float(N * C * hw_t)
    source_skews = jnp.abs(s3 / cnt_s)
    source_kurtoses = jnp.abs(s4 / cnt_s - 3.0)
    target_skews = jnp.abs(t3 / cnt_t)
    target_kurtoses = jnp.abs(t4 / cnt_t - 3.0)
    # F.nll_loss default mean reduction: average over every label-map pixel.
    source_norm_loss = s_nll / float(N * hw_s)
    target_norm_loss = t_nll / float(N * hw_t)

    return (fake_source_feat, fake_target_feat,
            source_skews, target_skews,
            source_kurtoses, target_kurtoses,
            source_norm_loss, target_norm_loss)


# ---------------------------------------------------------------------------
# Pure-JAX reference (mirrors the PyTorch forward) for correctness checking.
# ---------------------------------------------------------------------------
def _reference(source_feat, target_feat, w1, w2, eps=EPS):
    N, C, H, W = source_feat.shape
    _N, _C, _H, _W = target_feat.shape
    s = source_feat.reshape(N, C, -1).astype(jnp.float32)
    t = target_feat.reshape(_N, _C, -1).astype(jnp.float32)
    sm = jnp.mean(s, -1, keepdims=True)
    sv = jnp.var(s, -1, ddof=1, keepdims=True)
    s_norm = (s - sm) / jnp.sqrt(sv + eps)
    tm = jnp.mean(t, -1, keepdims=True)
    tv = jnp.var(t, -1, ddof=1, keepdims=True)
    t_norm = (t - tm) / jnp.sqrt(tv + eps)
    fake_src = (t_norm * jnp.sqrt(sm + eps) + sv).reshape(_N, _C, _H, _W)
    fake_tgt = (s_norm * jnp.sqrt(tm + eps) + tv).reshape(N, C, H, W)
    s_skew = jnp.abs(jnp.mean(s_norm ** 3))
    s_kurt = jnp.abs(jnp.mean(s_norm ** 4) - 3.0)
    t_skew = jnp.abs(jnp.mean(t_norm ** 3))
    t_kurt = jnp.abs(jnp.mean(t_norm ** 4) - 3.0)

    def da_loss(norm, label):
        h = jnp.maximum(jnp.einsum("hc,ncp->nhp", w1, norm), 0.0)
        score = jnp.einsum("kh,nhp->nkp", w2, h)          # (N, 2, P)
        logp = jax.nn.log_softmax(score, axis=1)
        return -jnp.mean(logp[:, label, :])

    return (fake_src, fake_tgt, s_skew, t_skew, s_kurt, t_kurt,
            da_loss(s_norm, 1), da_loss(t_norm, 0))


def _check(outs, refs, names, rtol=5e-3, atol=1e-3):
    for name, got, want in zip(names, outs, refs):
        np.testing.assert_allclose(np.asarray(got), np.asarray(want),
                                   rtol=rtol, atol=atol, err_msg=name)


if __name__ == "__main__":
    key = jax.random.PRNGKey(0)
    k1, k2, k3, k4 = jax.random.split(key, 4)

    names = ["fake_source", "fake_target", "s_skew", "t_skew",
             "s_kurt", "t_kurt", "s_loss", "t_loss"]

    # --- Test 1: small shapes, single C block (first == last in one step). ---
    N, C, H, W = 2, 4, 16, 16
    HIDDEN = 32   # stand-in for _ImageDA's 512-wide Conv1 (same shape logic)

    # Positive-mean inputs so sqrt(mean + eps) stays finite (matches real
    # post-ReLU backbone features; the reference math NaNs otherwise).
    source_feat = jax.random.uniform(k1, (N, C, H, W), jnp.float32) + 0.1
    target_feat = jax.random.uniform(k2, (N, C, H, W), jnp.float32) + 0.1
    da_w1 = jax.random.normal(k3, (HIDDEN, C), jnp.float32) * 0.05
    da_w2 = jax.random.normal(k4, (2, HIDDEN), jnp.float32) * 0.05

    outs = jax.block_until_ready(
        adain_with_chaos(source_feat, target_feat, da_w1, da_w2))
    refs = _reference(source_feat, target_feat, da_w1, da_w2)
    _check(outs, refs, names)
    assert outs[0].shape == (N, C, H, W) and outs[1].shape == (N, C, H, W)
    assert all(bool(jnp.isfinite(v)) for v in outs[2:])

    # --- Test 2: multi-C-block accumulation + unaligned HW (64 < 128). ---
    N2, C2, H2, W2 = 1, 256, 8, 8
    s2 = jax.random.uniform(k1, (N2, C2, H2, W2), jnp.float32) + 0.1
    t2 = jax.random.uniform(k2, (N2, C2, H2, W2), jnp.float32) + 0.1
    w1_2 = jax.random.normal(k3, (HIDDEN, C2), jnp.float32) * 0.02
    w2_2 = jax.random.normal(k4, (2, HIDDEN), jnp.float32) * 0.05

    outs2 = jax.block_until_ready(
        adain_with_chaos(s2, t2, w1_2, w2_2, c_block=128))
    refs2 = _reference(s2, t2, w1_2, w2_2)
    _check(outs2, refs2, names)

    print("KERNEL_OK")
</pallas_src>

<mosaic_0001>
module attributes {stable_mosaic.version = 11 : i64} {
  func.func @_adain_chaos_kernel(%arg0: i32, %arg1: i32, %arg2: memref<1x4x256xf32, #tpu.memory_space<vmem>>, %arg3: memref<1x4x256xf32, #tpu.memory_space<vmem>>, %arg4: memref<32x4xbf16, #tpu.memory_space<vmem>>, %arg5: memref<1x32xf32, #tpu.memory_space<vmem>>, %arg6: memref<1x4x256xf32, #tpu.memory_space<vmem>>, %arg7: memref<1x4x256xf32, #tpu.memory_space<vmem>>, %arg8: memref<1x1x8xf32, #tpu.memory_space<vmem>>, %arg9: memref<32x256xf32, #tpu.memory_space<vmem>>, %arg10: memref<32x256xf32, #tpu.memory_space<vmem>>) attributes {dimension_semantics = [#tpu.dimension_semantics<parallel>, #tpu.dimension_semantics<arbitrary>], iteration_bounds = array<i64: 2, 1>, scalar_prefetch = 0 : i64, scratch_operands = 2 : i64, tpu.core_type = #tpu.core_type<tc>, window_params = [{transform_indices = @transform_0, window_bounds = array<i64: 1, 4, 256>}, {transform_indices = @transform_1, window_bounds = array<i64: 1, 4, 256>}, {transform_indices = @transform_2, window_bounds = array<i64: 32, 4>}, {pipeline_mode = #tpu.pipeline_mode<synchronous>, transform_indices = @transform_3, window_bounds = array<i64: 1, 32>}, {transform_indices = @transform_4, window_bounds = array<i64: 1, 4, 256>}, {transform_indices = @transform_5, window_bounds = array<i64: 1, 4, 256>}, {transform_indices = @transform_6, window_bounds = array<i64: 1, 1, 8>}]} {
    %c0_i32 = arith.constant 0 : i32
    %0 = arith.cmpi eq, %arg1, %c0_i32 : i32
    %c0_i32_0 = arith.constant 0 : i32
    %1 = arith.cmpi eq, %arg1, %c0_i32_0 : i32
    %c0 = arith.constant 0 : index
    %c0_1 = arith.constant 0 : index
    %c0_2 = arith.constant 0 : index
    %2 = vector.load %arg2[%c0, %c0_1, %c0_2] : memref<1x4x256xf32, #tpu.memory_space<vmem>>, vector<1x4x256xf32>
    %3 = vector.shape_cast %2 : vector<1x4x256xf32> to vector<4x256xf32>
    %c0_3 = arith.constant 0 : index
    %c0_4 = arith.constant 0 : index
    %c0_5 = arith.constant 0 : index
    %4 = vector.load %arg3[%c0_3, %c0_4, %c0_5] : memref<1x4x256xf32, #tpu.memory_space<vmem>>, vector<1x4x256xf32>
    %5 = vector.shape_cast %4 : vector<1x4x256xf32> to vector<4x256xf32>
    %cst = arith.constant dense<0.000000e+00> : vector<4xf32>
    %6 = vector.multi_reduction <add>, %3, %cst [1] : vector<4x256xf32> to vector<4xf32>
    %7 = vector.shape_cast %6 : vector<4xf32> to vector<4x1xf32>
    %cst_6 = arith.constant 3.906250e-03 : f32
    %8 = vector.broadcast %cst_6 : f32 to vector<4x1xf32>
    %9 = arith.mulf %7, %8 : vector<4x1xf32>
    %10 = vector.broadcast %9 : vector<4x1xf32> to vector<4x256xf32>
    %11 = arith.subf %3, %10 : vector<4x256xf32>
    %12 = arith.mulf %11, %11 : vector<4x256xf32>
    %cst_7 = arith.constant dense<0.000000e+00> : vector<4xf32>
    %13 = vector.multi_reduction <add>, %12, %cst_7 [1] : vector<4x256xf32> to vector<4xf32>
    %14 = vector.shape_cast %13 : vector<4xf32> to vector<4x1xf32>
    %cst_8 = arith.constant 0.00392156886 : f32
    %15 = vector.broadcast %cst_8 : f32 to vector<4x1xf32>
    %16 = arith.mulf %14, %15 : vector<4x1xf32>
    %cst_9 = arith.constant 9.99999974E-6 : f32
    %17 = vector.broadcast %cst_9 : f32 to vector<4x1xf32>
    %18 = arith.addf %16, %17 : vector<4x1xf32>
    %19 = math.sqrt %18 : vector<4x1xf32>
    %cst_10 = arith.constant 1.000000e+00 : f32
    %20 = vector.broadcast %cst_10 : f32 to vector<4x1xf32>
    %21 = arith.divf %20, %19 : vector<4x1xf32>
    %22 = vector.broadcast %21 : vector<4x1xf32> to vector<4x256xf32>
    %23 = arith.mulf %11, %22 : vector<4x256xf32>
    %cst_11 = arith.constant dense<0.000000e+00> : vector<4xf32>
    %24 = vector.multi_reduction <add>, %5, %cst_11 [1] : vector<4x256xf32> to vector<4xf32>
    %25 = vector.shape_cast %24 : vector<4xf32> to vector<4x1xf32>
    %cst_12 = arith.constant 3.906250e-03 : f32
    %26 = vector.broadcast %cst_12 : f32 to vector<4x1xf32>
    %27 = arith.mulf %25, %26 : vector<4x1xf32>
    %28 = vector.broadcast %27 : vector<4x1xf32> to vector<4x256xf32>
    %29 = arith.subf %5, %28 : vector<4x256xf32>
    %30 = arith.mulf %29, %29 : vector<4x256xf32>
    %cst_13 = arith.constant dense<0.000000e+00> : vector<4xf32>
    %31 = vector.multi_reduction <add>, %30, %cst_13 [1] : vector<4x256xf32> to vector<4xf32>
    %32 = vector.shape_cast %31 : vector<4xf32> to vector<4x1xf32>
    %cst_14 = arith.constant 0.00392156886 : f32
    %33 = vector.broadcast %cst_14 : f32 to vector<4x1xf32>
    %34 = arith.mulf %32, %33 : vector<4x1xf32>
    %cst_15 = arith.constant 9.99999974E-6 : f32
    %35 = vector.broadcast %cst_15 : f32 to vector<4x1xf32>
    %36 = arith.addf %34, %35 : vector<4x1xf32>
    %37 = math.sqrt %36 : vector<4x1xf32>
    %cst_16 = arith.constant 1.000000e+00 : f32
    %38 = vector.broadcast %cst_16 : f32 to vector<4x1xf32>
    %39 = arith.divf %38, %37 : vector<4x1xf32>
    %40 = vector.broadcast %39 : vector<4x1xf32> to vector<4x256xf32>
    %41 = arith.mulf %29, %40 : vector<4x256xf32>
    %cst_17 = arith.constant 9.99999974E-6 : f32
    %42 = vector.broadcast %cst_17 : f32 to vector<4x1xf32>
    %43 = arith.addf %9, %42 : vector<4x1xf32>
    %44 = math.sqrt %43 : vector<4x1xf32>
    %45 = vector.broadcast %44 : vector<4x1xf32> to vector<4x256xf32>
    %46 = arith.mulf %41, %45 : vector<4x256xf32>
    %47 = vector.broadcast %16 : vector<4x1xf32> to vector<4x256xf32>
    %48 = arith.addf %46, %47 : vector<4x256xf32>
    %c0_18 = arith.constant 0 : index
    %c0_19 = arith.constant 0 : index
    %c0_20 = arith.constant 0 : index
    %49 = vector.load %arg6[%c0_18, %c0_19, %c0_20] : memref<1x4x256xf32, #tpu.memory_space<vmem>>, vector<1x4x256xf32>
    %50 = vector.shape_cast %49 : vector<1x4x256xf32> to vector<4x256xf32>
    %51 = vector.shape_cast %48 : vector<4x256xf32> to vector<1x4x256xf32>
    tpu.vector_store %arg6[%c0_18, %c0_19, %c0_20], %51 {strides = array<i32>} : memref<1x4x256xf32, #tpu.memory_space<vmem>>, vector<1x4x256xf32>,
    %cst_21 = arith.constant 9.99999974E-6 : f32
    %52 = vector.broadcast %cst_21 : f32 to vector<4x1xf32>
    %53 = arith.addf %27, %52 : vector<4x1xf32>
    %54 = math.sqrt %53 : vector<4x1xf32>
    %55 = vector.broadcast %54 : vector<4x1xf32> to vector<4x256xf32>
    %56 = arith.mulf %23, %55 : vector<4x256xf32>
    %57 = vector.broadcast %34 : vector<4x1xf32> to vector<4x256xf32>
    %58 = arith.addf %56, %57 : vector<4x256xf32>
    %c0_22 = arith.constant 0 : index
    %c0_23 = arith.constant 0 : index
    %c0_24 = arith.constant 0 : index
    %59 = vector.load %arg7[%c0_22, %c0_23, %c0_24] : memref<1x4x256xf32, #tpu.memory_space<vmem>>, vector<1x4x256xf32>
    %60 = vector.shape_cast %59 : vector<1x4x256xf32> to vector<4x256xf32>
    %61 = vector.shape_cast %58 : vector<4x256xf32> to vector<1x4x256xf32>
    tpu.vector_store %arg7[%c0_22, %c0_23, %c0_24], %61 {strides = array<i32>} : memref<1x4x256xf32, #tpu.memory_space<vmem>>, vector<1x4x256xf32>,
    %62 = arith.mulf %23, %23 : vector<4x256xf32>
    %63 = arith.mulf %62, %23 : vector<4x256xf32>
    %64 = vector.shape_cast %63 : vector<4x256xf32> to vector<1x4x256xf32>
    %cst_25 = arith.constant dense<0.000000e+00> : vector<1xf32>
    %65 = vector.multi_reduction <add>, %64, %cst_25 [1, 2] : vector<1x4x256xf32> to vector<1xf32>
    %66 = vector.shape_cast %65 : vector<1xf32> to vector<1x1x1xf32>
    %67 = vector.extract %66[0, 0, 0] : f32 from vector<1x1x1xf32>
    %68 = vector.broadcast %67 : f32 to vector<1x1xf32>
    %69 = vector.shape_cast %68 : vector<1x1xf32> to vector<1x1x1xf32>
    %70 = arith.mulf %62, %62 : vector<4x256xf32>
    %71 = vector.shape_cast %70 : vector<4x256xf32> to vector<1x4x256xf32>
    %cst_26 = arith.constant dense<0.000000e+00> : vector<1xf32>
    %72 = vector.multi_reduction <add>, %71, %cst_26 [1, 2] : vector<1x4x256xf32> to vector<1xf32>
    %73 = vector.shape_cast %72 : vector<1xf32> to vector<1x1x1xf32>
    %74 = vector.extract %73[0, 0, 0] : f32 from vector<1x1x1xf32>
    %75 = vector.broadcast %74 : f32 to vector<1x1xf32>
    %76 = vector.shape_cast %75 : vector<1x1xf32> to vector<1x1x1xf32>
    %77 = arith.mulf %41, %41 : vector<4x256xf32>
    %78 = arith.mulf %77, %41 : vector<4x256xf32>
    %79 = vector.shape_cast %78 : vector<4x256xf32> to vector<1x4x256xf32>
    %cst_27 = arith.constant dense<0.000000e+00> : vector<1xf32>
    %80 = vector.multi_reduction <add>, %79, %cst_27 [1, 2] : vector<1x4x256xf32> to vector<1xf32>
    %81 = vector.shape_cast %80 : vector<1xf32> to vector<1x1x1xf32>
    %82 = vector.extract %81[0, 0, 0] : f32 from vector<1x1x1xf32>
    %83 = vector.broadcast %82 : f32 to vector<1x1xf32>
    %84 = vector.shape_cast %83 : vector<1x1xf32> to vector<1x1x1xf32>
    %85 = arith.mulf %77, %77 : vector<4x256xf32>
    %86 = vector.shape_cast %85 : vector<4x256xf32> to vector<1x4x256xf32>
    %cst_28 = arith.constant dense<0.000000e+00> : vector<1xf32>
    %87 = vector.multi_reduction <add>, %86, %cst_28 [1, 2] : vector<1x4x256xf32> to vector<1xf32>
    %88 = vector.shape_cast %87 : vector<1xf32> to vector<1x1x1xf32>
    %89 = vector.extract %88[0, 0, 0] : f32 from vector<1x1x1xf32>
    %90 = vector.broadcast %89 : f32 to vector<1x1xf32>
    %91 = vector.shape_cast %90 : vector<1x1xf32> to vector<1x1x1xf32>
    %92 = arith.extui %0 : i1 to i32
    %c0_i32_29 = arith.constant 0 : i32
    %93 = arith.cmpi ne, %92, %c0_i32_29 : i32
    scf.if %93 {
      %cst_54 = arith.constant 0.000000e+00 : f32
      %138 = vector.broadcast %cst_54 : f32 to vector<1x1x8xf32>
      %c0_55 = arith.constant 0 : index
      %c0_56 = arith.constant 0 : index
      %c0_57 = arith.constant 0 : index
      %139 = vector.load %arg8[%c0_55, %c0_56, %c0_57] : memref<1x1x8xf32, #tpu.memory_space<vmem>>, vector<1x1x8xf32>
      tpu.vector_store %arg8[%c0_55, %c0_56, %c0_57], %138 {strides = array<i32>} : memref<1x1x8xf32, #tpu.memory_space<vmem>>, vector<1x1x8xf32>,
      %cst_58 = arith.constant 0.000000e+00 : f32
      %140 = vector.broadcast %cst_58 : f32 to vector<32x256xf32>
      %c0_59 = arith.constant 0 : index
      %c0_60 = arith.constant 0 : index
      %141 = vector.load %arg9[%c0_59, %c0_60] : memref<32x256xf32, #tpu.memory_space<vmem>>, vector<32x256xf32>
      tpu.vector_store %arg9[%c0_59, %c0_60], %140 {strides = array<i32>} : memref<32x256xf32, #tpu.memory_space<vmem>>, vector<32x256xf32>,
      %cst_61 = arith.constant 0.000000e+00 : f32
      %142 = vector.broadcast %cst_61 : f32 to vector<32x256xf32>
      %c0_62 = arith.constant 0 : index
      %c0_63 = arith.constant 0 : index
      %143 = vector.load %arg10[%c0_62, %c0_63] : memref<32x256xf32, #tpu.memory_space<vmem>>, vector<32x256xf32>
      tpu.vector_store %arg10[%c0_62, %c0_63], %142 {strides = array<i32>} : memref<32x256xf32, #tpu.memory_space<vmem>>, vector<32x256xf32>,
    } else {
    }
    %94 = tpu.iota {dimensions = array<i32: 2>} : vector<1x1x8xi32>
    %c0_30 = arith.constant 0 : index
    %c0_31 = arith.constant 0 : index
    %c0_32 = arith.constant 0 : index
    %95 = vector.load %arg8[%c0_30, %c0_31, %c0_32] : memref<1x1x8xf32, #tpu.memory_space<vmem>>, vector<1x1x8xf32>
    %c0_i32_33 = arith.constant 0 : i32
    %96 = vector.broadcast %c0_i32_33 : i32 to vector<1x1x8xi32>
    %97 = arith.cmpi eq, %94, %96 : vector<1x1x8xi32>
    %cst_34 = arith.constant 0.000000e+00 : f32
    %98 = vector.shape_cast %69 : vector<1x1x1xf32> to vector<1x1x1xf32>
    %99 = vector.broadcast %98 : vector<1x1x1xf32> to vector<1x1x8xf32>
    %100 = vector.broadcast %cst_34 : f32 to vector<1x1x8xf32>
    %101 = arith.select %97, %99, %100 : vector<1x1x8xi1>, vector<1x1x8xf32>
    %c1_i32 = arith.constant 1 : i32
    %102 = vector.broadcast %c1_i32 : i32 to vector<1x1x8xi32>
    %103 = arith.cmpi eq, %94, %102 : vector<1x1x8xi32>
    %cst_35 = arith.constant 0.000000e+00 : f32
    %104 = vector.shape_cast %76 : vector<1x1x1xf32> to vector<1x1x1xf32>
    %105 = vector.broadcast %104 : vector<1x1x1xf32> to vector<1x1x8xf32>
    %106 = vector.broadcast %cst_35 : f32 to vector<1x1x8xf32>
    %107 = arith.select %103, %105, %106 : vector<1x1x8xi1>, vector<1x1x8xf32>
    %108 = arith.addf %101, %107 : vector<1x1x8xf32>
    %c2_i32 = arith.constant 2 : i32
    %109 = vector.broadcast %c2_i32 : i32 to vector<1x1x8xi32>
    %110 = arith.cmpi eq, %94, %109 : vector<1x1x8xi32>
    %cst_36 = arith.constant 0.000000e+00 : f32
    %111 = vector.shape_cast %84 : vector<1x1x1xf32> to vector<1x1x1xf32>
    %112 = vector.broadcast %111 : vector<1x1x1xf32> to vector<1x1x8xf32>
    %113 = vector.broadcast %cst_36 : f32 to vector<1x1x8xf32>
    %114 = arith.select %110, %112, %113 : vector<1x1x8xi1>, vector<1x1x8xf32>
    %115 = arith.addf %108, %114 : vector<1x1x8xf32>
    %c3_i32 = arith.constant 3 : i32
    %116 = vector.broadcast %c3_i32 : i32 to vector<1x1x8xi32>
    %117 = arith.cmpi eq, %94, %116 : vector<1x1x8xi32>
    %cst_37 = arith.constant 0.000000e+00 : f32
    %118 = vector.shape_cast %91 : vector<1x1x1xf32> to vector<1x1x1xf32>
    %119 = vector.broadcast %118 : vector<1x1x1xf32> to vector<1x1x8xf32>
    %120 = vector.broadcast %cst_37 : f32 to vector<1x1x8xf32>
    %121 = arith.select %117, %119, %120 : vector<1x1x8xi1>, vector<1x1x8xf32>
    %122 = arith.addf %115, %121 : vector<1x1x8xf32>
    %123 = arith.addf %95, %122 : vector<1x1x8xf32>
    %c0_38 = arith.constant 0 : index
    %c0_39 = arith.constant 0 : index
    %c0_40 = arith.constant 0 : index
    %124 = vector.load %arg8[%c0_38, %c0_39, %c0_40] : memref<1x1x8xf32, #tpu.memory_space<vmem>>, vector<1x1x8xf32>
    tpu.vector_store %arg8[%c0_38, %c0_39, %c0_40], %123 {strides = array<i32>} : memref<1x1x8xf32, #tpu.memory_space<vmem>>, vector<1x1x8xf32>,
    %c0_41 = arith.constant 0 : index
    %c0_42 = arith.constant 0 : index
    %125 = vector.load %arg4[%c0_41, %c0_42] : memref<32x4xbf16, #tpu.memory_space<vmem>>, vector<32x4xbf16>
    %c0_43 = arith.constant 0 : index
    %c0_44 = arith.constant 0 : index
    %126 = vector.load %arg9[%c0_43, %c0_44] : memref<32x256xf32, #tpu.memory_space<vmem>>, vector<32x256xf32>
    %127 = arith.truncf %23 : vector<4x256xf32> to vector<4x256xbf16>
    %cst_45 = arith.constant dense<0.000000e+00> : vector<32x256xf32>
    %128 = tpu.matmul %125, %127, %cst_45 {dimension_numbers = #tpu.dot_dimension_numbers<[1], [0], [0], [1], [0, 0, 1, 1], [], []>} : vector<32x4xbf16>, vector<4x256xbf16>, vector<32x256xf32> -> vector<32x256xf32>
    %129 = arith.addf %126, %128 : vector<32x256xf32>
    %c0_46 = arith.constant 0 : index
    %c0_47 = arith.constant 0 : index
    %130 = vector.load %arg9[%c0_46, %c0_47] : memref<32x256xf32, #tpu.memory_space<vmem>>, vector<32x256xf32>
    tpu.vector_store %arg9[%c0_46, %c0_47], %129 {strides = array<i32>} : memref<32x256xf32, #tpu.memory_space<vmem>>, vector<32x256xf32>,
    %c0_48 = arith.constant 0 : index
    %c0_49 = arith.constant 0 : index
    %131 = vector.load %arg10[%c0_48, %c0_49] : memref<32x256xf32, #tpu.memory_space<vmem>>, vector<32x256xf32>
    %132 = arith.truncf %41 : vector<4x256xf32> to vector<4x256xbf16>
    %cst_50 = arith.constant dense<0.000000e+00> : vector<32x256xf32>
    %133 = tpu.matmul %125, %132, %cst_50 {dimension_numbers = #tpu.dot_dimension_numbers<[1], [0], [0], [1], [0, 0, 1, 1], [], []>} : vector<32x4xbf16>, vector<4x256xbf16>, vector<32x256xf32> -> vector<32x256xf32>
    %134 = arith.addf %131, %133 : vector<32x256xf32>
    %c0_51 = arith.constant 0 : index
    %c0_52 = arith.constant 0 : index
    %135 = vector.load %arg10[%c0_51, %c0_52] : memref<32x256xf32, #tpu.memory_space<vmem>>, vector<32x256xf32>
    tpu.vector_store %arg10[%c0_51, %c0_52], %134 {strides = array<i32>} : memref<32x256xf32, #tpu.memory_space<vmem>>, vector<32x256xf32>,
    %136 = arith.extui %1 : i1 to i32
    %c0_i32_53 = arith.constant 0 : i32
    %137 = arith.cmpi ne, %136, %c0_i32_53 : i32
    scf.if %137 {
      %c0_54 = arith.constant 0 : index
      %c0_55 = arith.constant 0 : index
      %138 = vector.load %arg5[%c0_54, %c0_55] : memref<1x32xf32, #tpu.memory_space<vmem>>, vector<1x32xf32>
      %c0_56 = arith.constant 0 : index
      %c0_57 = arith.constant 0 : index
      %139 = vector.load %arg9[%c0_56, %c0_57] : memref<32x256xf32, #tpu.memory_space<vmem>>, vector<32x256xf32>
      %cst_58 = arith.constant 0.000000e+00 : f32
      %140 = vector.broadcast %cst_58 : f32 to vector<32x256xf32>
      %141 = arith.maximumf %139, %140 : vector<32x256xf32>
      %cst_59 = arith.constant dense<0.000000e+00> : vector<1x256xf32>
      %142 = tpu.matmul %138, %141, %cst_59 {dimension_numbers = #tpu.dot_dimension_numbers<[1], [0], [0], [1], [0, 0, 1, 1], [], []>} : vector<1x32xf32>, vector<32x256xf32>, vector<1x256xf32> -> vector<1x256xf32>
      %cst_60 = arith.constant -1.000000e+00 : f32
      %143 = vector.broadcast %cst_60 : f32 to vector<1x256xf32>
      %144 = arith.mulf %143, %142 : vector<1x256xf32>
      %cst_61 = arith.constant 0.000000e+00 : f32
      %145 = vector.broadcast %cst_61 : f32 to vector<1x256xf32>
      %146 = arith.maximumf %144, %145 : vector<1x256xf32>
      %147 = math.absf %144 : vector<1x256xf32>
      %cst_62 = arith.constant 0.000000e+00 : f32
      %148 = vector.broadcast %cst_62 : f32 to vector<1x256xf32>
      %149 = arith.subf %148, %147 : vector<1x256xf32>
      %150 = math.exp %149 : vector<1x256xf32>
      %151 = math.log1p %150 : vector<1x256xf32>
      %152 = arith.addf %146, %151 : vector<1x256xf32>
      %153 = vector.shape_cast %152 : vector<1x256xf32> to vector<1x1x256xf32>
      %cst_63 = arith.constant dense<0.000000e+00> : vector<1xf32>
      %154 = vector.multi_reduction <add>, %153, %cst_63 [1, 2] : vector<1x1x256xf32> to vector<1xf32>
      %155 = vector.shape_cast %154 : vector<1xf32> to vector<1x1x1xf32>
      %156 = vector.extract %155[0, 0, 0] : f32 from vector<1x1x1xf32>
      %157 = vector.broadcast %156 : f32 to vector<1x1xf32>
      %158 = vector.shape_cast %157 : vector<1x1xf32> to vector<1x1x1xf32>
      %c0_64 = arith.constant 0 : index
      %c0_65 = arith.constant 0 : index
      %159 = vector.load %arg10[%c0_64, %c0_65] : memref<32x256xf32, #tpu.memory_space<vmem>>, vector<32x256xf32>
      %cst_66 = arith.constant 0.000000e+00 : f32
      %160 = vector.broadcast %cst_66 : f32 to vector<32x256xf32>
      %161 = arith.maximumf %159, %160 : vector<32x256xf32>
      %cst_67 = arith.constant dense<0.000000e+00> : vector<1x256xf32>
      %162 = tpu.matmul %138, %161, %cst_67 {dimension_numbers = #tpu.dot_dimension_numbers<[1], [0], [0], [1], [0, 0, 1, 1], [], []>} : vector<1x32xf32>, vector<32x256xf32>, vector<1x256xf32> -> vector<1x256xf32>
      %cst_68 = arith.constant 1.000000e+00 : f32
      %163 = vector.broadcast %cst_68 : f32 to vector<1x256xf32>
      %164 = arith.mulf %163, %162 : vector<1x256xf32>
      %cst_69 = arith.constant 0.000000e+00 : f32
      %165 = vector.broadcast %cst_69 : f32 to vector<1x256xf32>
      %166 = arith.maximumf %164, %165 : vector<1x256xf32>
      %167 = math.absf %164 : vector<1x256xf32>
      %cst_70 = arith.constant 0.000000e+00 : f32
      %168 = vector.broadcast %cst_70 : f32 to vector<1x256xf32>
      %169 = arith.subf %168, %167 : vector<1x256xf32>
      %170 = math.exp %169 : vector<1x256xf32>
      %171 = math.log1p %170 : vector<1x256xf32>
      %172 = arith.addf %166, %171 : vector<1x256xf32>
      %173 = vector.shape_cast %172 : vector<1x256xf32> to vector<1x1x256xf32>
      %cst_71 = arith.constant dense<0.000000e+00> : vector<1xf32>
      %174 = vector.multi_reduction <add>, %173, %cst_71 [1, 2] : vector<1x1x256xf32> to vector<1xf32>
      %175 = vector.shape_cast %174 : vector<1xf32> to vector<1x1x1xf32>
      %176 = vector.extract %175[0, 0, 0] : f32 from vector<1x1x1xf32>
      %177 = vector.broadcast %176 : f32 to vector<1x1xf32>
      %178 = vector.shape_cast %177 : vector<1x1xf32> to vector<1x1x1xf32>
      %c0_72 = arith.constant 0 : index
      %c0_73 = arith.constant 0 : index
      %c0_74 = arith.constant 0 : index
      %179 = vector.load %arg8[%c0_72, %c0_73, %c0_74] : memref<1x1x8xf32, #tpu.memory_space<vmem>>, vector<1x1x8xf32>
      %c4_i32 = arith.constant 4 : i32
      %180 = vector.broadcast %c4_i32 : i32 to vector<1x1x8xi32>
      %181 = arith.cmpi eq, %94, %180 : vector<1x1x8xi32>
      %cst_75 = arith.constant 0.000000e+00 : f32
      %182 = vector.shape_cast %158 : vector<1x1x1xf32> to vector<1x1x1xf32>
      %183 = vector.broadcast %182 : vector<1x1x1xf32> to vector<1x1x8xf32>
      %184 = vector.broadcast %cst_75 : f32 to vector<1x1x8xf32>
      %185 = arith.select %181, %183, %184 : vector<1x1x8xi1>, vector<1x1x8xf32>
      %c5_i32 = arith.constant 5 : i32
      %186 = vector.broadcast %c5_i32 : i32 to vector<1x1x8xi32>
      %187 = arith.cmpi eq, %94, %186 : vector<1x1x8xi32>
      %cst_76 = arith.constant 0.000000e+00 : f32
      %188 = vector.shape_cast %178 : vector<1x1x1xf32> to vector<1x1x1xf32>
      %189 = vector.broadcast %188 : vector<1x1x1xf32> to vector<1x1x8xf32>
      %190 = vector.broadcast %cst_76 : f32 to vector<1x1x8xf32>
      %191 = arith.select %187, %189, %190 : vector<1x1x8xi1>, vector<1x1x8xf32>
      %192 = arith.addf %185, %191 : vector<1x1x8xf32>
      %193 = arith.addf %179, %192 : vector<1x1x8xf32>
      %c0_77 = arith.constant 0 : index
      %c0_78 = arith.constant 0 : index
      %c0_79 = arith.constant 0 : index
      %194 = vector.load %arg8[%c0_77, %c0_78, %c0_79] : memref<1x1x8xf32, #tpu.memory_space<vmem>>, vector<1x1x8xf32>
      tpu.vector_store %arg8[%c0_77, %c0_78, %c0_79], %193 {strides = array<i32>} : memref<1x1x8xf32, #tpu.memory_space<vmem>>, vector<1x1x8xf32>,
    } else {
    }
    return
  }
  func.func @transform_0(%arg0: i32, %arg1: i32) -> (i32, i32, i32) {
    %c0_i32 = arith.constant 0 : i32
    %c0_i32_0 = arith.constant 0 : i32
    return %arg0, %arg1, %c0_i32 : i32, i32, i32
  }
  func.func @transform_1(%arg0: i32, %arg1: i32) -> (i32, i32, i32) {
    %c0_i32 = arith.constant 0 : i32
    %c0_i32_0 = arith.constant 0 : i32
    return %arg0, %arg1, %c0_i32 : i32, i32, i32
  }
  func.func @transform_2(%arg0: i32, %arg1: i32) -> (i32, i32) {
    %c0_i32 = arith.constant 0 : i32
    %c0_i32_0 = arith.constant 0 : i32
    return %c0_i32, %arg1 : i32, i32
  }
  func.func @transform_3(%arg0: i32, %arg1: i32) -> (i32, i32) {
    %c0_i32 = arith.constant 0 : i32
    %c0_i32_0 = arith.constant 0 : i32
    %c0_i32_1 = arith.constant 0 : i32
    return %c0_i32, %c0_i32_0 : i32, i32
  }
  func.func @transform_4(%arg0: i32, %arg1: i32) -> (i32, i32, i32) {
    %c0_i32 = arith.constant 0 : i32
    %c0_i32_0 = arith.constant 0 : i32
    return %arg0, %arg1, %c0_i32 : i32, i32, i32
  }
  func.func @transform_5(%arg0: i32, %arg1: i32) -> (i32, i32, i32) {
    %c0_i32 = arith.constant 0 : i32
    %c0_i32_0 = arith.constant 0 : i32
    return %arg0, %arg1, %c0_i32 : i32, i32, i32
  }
  func.func @transform_6(%arg0: i32, %arg1: i32) -> (i32, i32, i32) {
    %c0_i32 = arith.constant 0 : i32
    %c0_i32_0 = arith.constant 0 : i32
    %c0_i32_1 = arith.constant 0 : i32
    return %arg0, %c0_i32, %c0_i32_0 : i32, i32, i32
  }
}

</mosaic_0001>

<llo_original>
// kernel: tpu_custom_call.1
$region0: #{tpu_custom_call.1}
  #allocation0 [shape = 'u32[]', space=smem, size = 0x4, offset = 0x4, fixed_abs, tag = 'smem constant byte address 0x4 - core index']
  #allocation1 [shape = 'u32[144,128]{1,0:T(1,128)}', space=vmem, size = 0x12000, scoped, tag = 'internal scratch']
  #allocation2 [shape = 'f32[32,256]{1,0:T(8,128)}', space=vmem, size = 0x8000, scoped, tag = 'scratch operand']
  #allocation3 [shape = 'f32[32,256]{1,0:T(8,128)}', space=vmem, size = 0x8000, scoped, tag = 'scratch operand']
  %s0 = inlined_call_operand.vmem [shape: f32[2,4,256], index: 0, kind: input, shape index: {}]
  %s1 = inlined_call_operand.hbm [shape: f32[2,4,256], index: 1, kind: input, shape index: {}]
  %s2 = inlined_call_operand.vmem [shape: bf16[32,4], index: 2, kind: input, shape index: {}]
  %s3 = inlined_call_operand.vmem [shape: f32[1,32], index: 3, kind: input, shape index: {}]
  %s4 = inlined_call_operand.hbm [shape: f32[2,4,256], index: 4, kind: output, shape index: {0}]
  %s5 = inlined_call_operand.hbm [shape: f32[2,4,256], index: 5, kind: output, shape index: {1}]
  %s6 = inlined_call_operand.hbm [shape: f32[2,1,8], index: 6, kind: output, shape index: {2}]
  %7 = xla_tuple %s4, %s5, %s6
  %s8 = sld [smem:[#allocation0]]
  $region77: #{tpu_custom_call.1} parent=0
    _
  %s10 = ssub.s32 1, %s8
  %s11 = scalar_select 0, %s10, %s8
  $region1: #{tpu_custom_call.1} parent=0
    #allocation4 [shape = 'u8[8192]{0}', space=vmem, size = 0x2000, scoped, tag = 'input window, operand 1']
    #allocation5 [shape = 's32[2]{0}', space=sflag, size = 0x8, scoped, tag = 'scoped memory for tpu_custom_call.1']
    #allocation6 [shape = 's32[2]{0}', space=sflag, size = 0x8, scoped, tag = 'scoped memory for tpu_custom_call.1']
    #allocation7 [shape = 'u8[8192]{0}', space=vmem, size = 0x2000, scoped, tag = 'output window, operand 0']
    #allocation8 [shape = 'u8[8192]{0}', space=vmem, size = 0x2000, scoped, tag = 'output window, operand 1']
    #allocation9 [shape = 's32[2]{0}', space=sflag, size = 0x8, scoped, tag = 'scoped memory for tpu_custom_call.1']
    #allocation10 [shape = 'u8[1024]{0}', space=vmem, size = 0x400, scoped, tag = 'output window, operand 2']
    %12 = vsyncpa [#allocation5], 0
    %s13 = scalar_lea.sflag [#allocation5], 1
    %14 = vsyncpa %s13, 0
    %15 = vsyncpa [#allocation6], 0
    %s16 = scalar_lea.sflag [#allocation6], 1
    %17 = vsyncpa %s16, 0
    %18 = vsyncpa [#allocation9], 0
    %s19 = scalar_lea.sflag [#allocation9], 1
    %20 = vsyncpa %s19, 0
    loop: start=0, step=1, limit=4
    $region2: #{tpu_custom_call.1} parent=1 // loop_pre_header
      _
    $region3: #{tpu_custom_call.1} parent=1 // loop_header
      %s22 = sphi 0, %s26
      %p23 = scmp.ge.s32.totalorder %s22, 4
      %s29 = sphi 0, %s41
      %s30 = sphi 0, %s37
      %s31 = sphi 0, %s29
      %s32 = sphi 0, %s30
      %s33 = sphi 0, %s31
      %s34 = sphi 0, %s32
      %s46 = sphi 0, %s48
      %s49 = sphi 0, %s46
      %s50 = sphi 0, %s49
      %s66 = sphi 0, %s50
      %s74 = sphi 0, %s76
      %s77 = sphi 0, %s74
      %s78 = sphi 0, %s77
      %s94 = sphi 0, %s78
      %s100 = sphi 0, %s102
      %s103 = sphi 0, %s100
      %s104 = sphi 0, %s103
      %s120 = sphi 0, %s104
      %s124 = sphi 0, %s124
      %s126 = sphi 0, %s124
      %s127 = sphi 0, %s126
      %s141 = sphi 0, %s127
      %s149 = sphi 0, %s151
      %s152 = sphi 0, %s149
      %s153 = sphi 0, %s152
      %s169 = sphi 0, %s153
      %s177 = sphi 0, %s179
      %s180 = sphi 0, %s177
      %s181 = sphi 0, %s180
      %s197 = sphi 0, %s181
      %s203 = sphi 0, %s205
      %s206 = sphi 0, %s203
      %s207 = sphi 0, %s206
      %s223 = sphi 0, %s207
    $region4: #{tpu_custom_call.1} parent=1 // loop_header_branch
      %25 = sbr.rel (%p23) target = $region8
    $region5: #{tpu_custom_call.1} parent=1 // loop_body
      %s27 = ssub.s32 %s22, 1
      %s28 = ssub.s32 %s22, 2
      %s35 = sadd.s32 1, %s30
      %p36 = scmp.ge.s32.totalorder %s35, 1
      %s37 = scalar_select %p36, 0, %s35
      %s38 = sadd.s32 1, %s29
      %s39 = scalar_select %p36, %s38, %s29
      %p40 = scmp.ge.s32.totalorder %s39, 2
      %s41 = scalar_select %p40, 0, %s39
      %s42 = ssub.s32 %s29, %s41
      %s43 = ssub.s32 %s30, %s37
      %s44 = sor.u32 %s42, %s43
      %p45 = scmp.eq.s32.totalorder %s44, 0
      %s47 = sadd.s32 %s46, 1
      %s48 = scalar_select %p45, %s46, %s47
      %p51 = pneg %p45
      %p52 = scmp.eq.s32.totalorder %s22, 1
      %p53 = por %p51, %p52
      %p54 = scmp.ne.s32.totalorder %s46, %s49
      %p55 = scmp.eq.s32.totalorder %s22, 0
      %p56 = por %p54, %p55
      %p57 = scmp.ne.s32.totalorder %s46, %s49
      %p58 = scmp.eq.s32.totalorder %s27, 1
      %p59 = por %p57, %p58
      %p60 = scmp.ne.s32.totalorder %s49, %s50
      %p61 = scmp.eq.s32.totalorder %s27, 0
      %p62 = por %p60, %p61
      %p63 = scmp.ne.s32.totalorder %s49, %s50
      %p64 = scmp.eq.s32.totalorder %s28, 1
      %p65 = por %p63, %p64
      %p67 = scmp.ne.s32.totalorder %s50, %s66
      %p68 = scmp.eq.s32.totalorder %s28, 0
      %p69 = por %p67, %p68
      %s70 = ssub.s32 %s29, %s41
      %s71 = ssub.s32 %s30, %s37
      %s72 = sor.u32 %s70, %s71
      %p73 = scmp.eq.s32.totalorder %s72, 0
      %s75 = sadd.s32 %s74, 1
      %s76 = scalar_select %p73, %s74, %s75
      %p79 = pneg %p73
      %p80 = scmp.eq.s32.totalorder %s22, 1
      %p81 = por %p79, %p80
      %p82 = scmp.ne.s32.totalorder %s74, %s77
      %p83 = scmp.eq.s32.totalorder %s22, 0
      %p84 = por %p82, %p83
      %p85 = scmp.ne.s32.totalorder %s74, %s77
      %p86 = scmp.eq.s32.totalorder %s27, 1
      %p87 = por %p85, %p86
      %p88 = scmp.ne.s32.totalorder %s77, %s78
      %p89 = scmp.eq.s32.totalorder %s27, 0
      %p90 = por %p88, %p89
      %p91 = scmp.ne.s32.totalorder %s77, %s78
      %p92 = scmp.eq.s32.totalorder %s28, 1
      %p93 = por %p91, %p92
      %p95 = scmp.ne.s32.totalorder %s78, %s94
      %p96 = scmp.eq.s32.totalorder %s28, 0
      %p97 = por %p95, %p96
      %s98 = ssub.s32 %s30, %s37
      %p99 = scmp.eq.s32.totalorder %s98, 0
      %s101 = sadd.s32 %s100, 1
      %s102 = scalar_select %p99, %s100, %s101
      %p105 = pneg %p99
      %p106 = scmp.eq.s32.totalorder %s22, 1
      %p107 = por %p105, %p106
      %p108 = scmp.ne.s32.totalorder %s100, %s103
      %p109 = scmp.eq.s32.totalorder %s22, 0
      %p110 = por %p108, %p109
      %p111 = scmp.ne.s32.totalorder %s100, %s103
      %p112 = scmp.eq.s32.totalorder %s27, 1
      %p113 = por %p111, %p112
      %p114 = scmp.ne.s32.totalorder %s103, %s104
      %p115 = scmp.eq.s32.totalorder %s27, 0
      %p116 = por %p114, %p115
      %p117 = scmp.ne.s32.totalorder %s103, %s104
      %p118 = scmp.eq.s32.totalorder %s28, 1
      %p119 = por %p117, %p118
      %p121 = scmp.ne.s32.totalorder %s104, %s120
      %p122 = scmp.eq.s32.totalorder %s28, 0
      %p123 = por %p121, %p122
      %s125 = sadd.s32 %s124, 1
      %p128 = scmp.eq.s32.totalorder %s22, 1
      %p129 = scmp.ne.s32.totalorder %s124, %s126
      %p130 = scmp.eq.s32.totalorder %s22, 0
      %p131 = por %p129, %p130
      %p132 = scmp.ne.s32.totalorder %s124, %s126
      %p133 = scmp.eq.s32.totalorder %s27, 1
      %p134 = por %p132, %p133
      %p135 = scmp.ne.s32.totalorder %s126, %s127
      %p136 = scmp.eq.s32.totalorder %s27, 0
      %p137 = por %p135, %p136
      %p138 = scmp.ne.s32.totalorder %s126, %s127
      %p139 = scmp.eq.s32.totalorder %s28, 1
      %p140 = por %p138, %p139
      %p142 = scmp.ne.s32.totalorder %s127, %s141
      %p143 = scmp.eq.s32.totalorder %s28, 0
      %p144 = por %p142, %p143
      %s145 = ssub.s32 %s29, %s41
      %s146 = ssub.s32 %s30, %s37
      %s147 = sor.u32 %s145, %s146
      %p148 = scmp.eq.s32.totalorder %s147, 0
      %s150 = sadd.s32 %s149, 1
      %s151 = scalar_select %p148, %s149, %s150
      %p154 = pneg %p148
      %p155 = scmp.eq.s32.totalorder %s22, 1
      %p156 = por %p154, %p155
      %p157 = scmp.ne.s32.totalorder %s149, %s152
      %p158 = scmp.eq.s32.totalorder %s22, 0
      %p159 = por %p157, %p158
      %p160 = scmp.ne.s32.totalorder %s149, %s152
      %p161 = scmp.eq.s32.totalorder %s27, 1
      %p162 = por %p160, %p161
      %p163 = scmp.ne.s32.totalorder %s152, %s153
      %p164 = scmp.eq.s32.totalorder %s27, 0
      %p165 = por %p163, %p164
      %p166 = scmp.ne.s32.totalorder %s152, %s153
      %p167 = scmp.eq.s32.totalorder %s28, 1
      %p168 = por %p166, %p167
      %p170 = scmp.ne.s32.totalorder %s153, %s169
      %p171 = scmp.eq.s32.totalorder %s28, 0
      %p172 = por %p170, %p171
      %s173 = ssub.s32 %s29, %s41
      %s174 = ssub.s32 %s30, %s37
      %s175 = sor.u32 %s173, %s174
      %p176 = scmp.eq.s32.totalorder %s175, 0
      %s178 = sadd.s32 %s177, 1
      %s179 = scalar_select %p176, %s177, %s178
      %p182 = pneg %p176
      %p183 = scmp.eq.s32.totalorder %s22, 1
      %p184 = por %p182, %p183
      %p185 = scmp.ne.s32.totalorder %s177, %s180
      %p186 = scmp.eq.s32.totalorder %s22, 0
      %p187 = por %p185, %p186
      %p188 = scmp.ne.s32.totalorder %s177, %s180
      %p189 = scmp.eq.s32.totalorder %s27, 1
      %p190 = por %p188, %p189
      %p191 = scmp.ne.s32.totalorder %s180, %s181
      %p192 = scmp.eq.s32.totalorder %s27, 0
      %p193 = por %p191, %p192
      %p194 = scmp.ne.s32.totalorder %s180, %s181
      %p195 = scmp.eq.s32.totalorder %s28, 1
      %p196 = por %p194, %p195
      %p198 = scmp.ne.s32.totalorder %s181, %s197
      %p199 = scmp.eq.s32.totalorder %s28, 0
      %p200 = por %p198, %p199
      %s201 = ssub.s32 %s29, %s41
      %p202 = scmp.eq.s32.totalorder %s201, 0
      %s204 = sadd.s32 %s203, 1
      %s205 = scalar_select %p202, %s203, %s204
      %p208 = pneg %p202
      %p209 = scmp.eq.s32.totalorder %s22, 1
      %p210 = por %p208, %p209
      %p211 = scmp.ne.s32.totalorder %s203, %s206
      %p212 = scmp.eq.s32.totalorder %s22, 0
      %p213 = por %p211, %p212
      %p214 = scmp.ne.s32.totalorder %s203, %s206
      %p215 = scmp.eq.s32.totalorder %s27, 1
      %p216 = por %p214, %p215
      %p217 = scmp.ne.s32.totalorder %s206, %s207
      %p218 = scmp.eq.s32.totalorder %s27, 0
      %p219 = por %p217, %p218
      %p220 = scmp.ne.s32.totalorder %s206, %s207
      %p221 = scmp.eq.s32.totalorder %s28, 1
      %p222 = por %p220, %p221
      %p224 = scmp.ne.s32.totalorder %s207, %s223
      %p225 = scmp.eq.s32.totalorder %s28, 0
      %p226 = por %p224, %p225
      %p227 = scmp.le.s32.totalorder 1, %s22
      %p228 = scmp.lt.s32.totalorder %s22, 3
      %p229 = pnand %p227, %p228
      %p230 = pneg %p229
      // Predicated region
      $region9: #{tpu_custom_call.1} parent=5 // pred_check
        _
      $region10: #{tpu_custom_call.1} parent=5 // pred_check_branch
        %232 = sbr.rel (%p229) target = $region12
      $region11: #{tpu_custom_call.1} parent=5 // pred_region
        %s233 = ssub.s32 %s22, 1
        // Predicated region
        $region13: #{tpu_custom_call.1} parent=11 // pred_check
          %p234 = pneg %p116
        $region14: #{tpu_custom_call.1} parent=11 // pred_check_branch
          %236 = sbr.rel (%p234) target = $region16
        $region15: #{tpu_custom_call.1} parent=11 // pred_region
          %p237 = scmp.lt.s32.totalorder %s32, 0
          %s238 = scalar_select %p237, %s32, 0
          %s239 = smul.addr %s238, 4
          %s240 = scalar_lea.vmem %s2, %s239
        $region16: #{tpu_custom_call.1} parent=11 // pred_fallthru
          _
        // Predicated region
        $region17: #{tpu_custom_call.1} parent=11 // pred_check
          %p241 = pneg %p137
        $region18: #{tpu_custom_call.1} parent=11 // pred_check_branch
          %243 = sbr.rel (%p241) target = $region20
        $region19: #{tpu_custom_call.1} parent=11 // pred_region
          _
        $region20: #{tpu_custom_call.1} parent=11 // pred_fallthru
          _
      $region12: #{tpu_custom_call.1} parent=5 // pred_fallthru
        _
      %p244 = scmp.lt.s32.totalorder %s22, 2
      // Predicated region
      $region21: #{tpu_custom_call.1} parent=5 // pred_check
        %p245 = pneg %p244
      $region22: #{tpu_custom_call.1} parent=5 // pred_check_branch
        %247 = sbr.rel (%p245) target = $region24
      $region23: #{tpu_custom_call.1} parent=5 // pred_region
        // Predicated region
        $region25: #{tpu_custom_call.1} parent=23 // pred_check
          %p248 = pneg %p56
        $region26: #{tpu_custom_call.1} parent=23 // pred_check_branch
          %250 = sbr.rel (%p248) target = $region28
        $region27: #{tpu_custom_call.1} parent=23 // pred_region
          %p251 = scmp.lt.s32.totalorder %s29, 1
          %s252 = scalar_select %p251, %s29, 1
          %p253 = scmp.lt.s32.totalorder %s30, 0
          %s254 = scalar_select %p253, %s30, 0
          %s255 = smul.addr %s254, 2
          %s256 = smul.addr %s252, 2
          %s257 = sadd.s32 %s255, %s256
          %s258 = smul.addr %s257, 4
          %s259 = scalar_lea.vmem %s0, %s258
        $region28: #{tpu_custom_call.1} parent=23 // pred_fallthru
          _
        // Predicated region
        $region29: #{tpu_custom_call.1} parent=23 // pred_check
          %p260 = pneg %p84
        $region30: #{tpu_custom_call.1} parent=23 // pred_check_branch
          %262 = sbr.rel (%p260) target = $region32
        $region31: #{tpu_custom_call.1} parent=23 // pred_region
          %s263 = sand.u32 %s74, 1
          %s264 = scalar_lea.sflag [#allocation5], %s263
          %s265 = sand.u32 %s74, 1
          %s266 = smul.addr %s265, 8
          %s267 = scalar_lea.vmem [#allocation4], %s266
          %s269 = ssub.s32 128, 128
          %270 = vsyncadd %s264, %s269
          %s271 = smul.addr %s30, 2
          %s272 = smul.addr %s29, 2
          %s273 = sadd.s32 %s271, %s272
          %s274 = smul.addr %s273, 64
          %s275 = scalar_lea.hbm %s1, %s274
          %s277 = sshll.u32 %s267, 4
          %s278 = int_to_ptr.vmem [resolvable:$true] %s277
          %280 = dma.hbm_to_vmem [thread:$0]  %s275, 128, %s278, %s264
        $region32: #{tpu_custom_call.1} parent=23 // pred_fallthru
          _
      $region24: #{tpu_custom_call.1} parent=5 // pred_fallthru
        _
      %p281 = scmp.le.s32.totalorder 1, %s22
      %p282 = scmp.lt.s32.totalorder %s22, 3
      %p283 = pnand %p281, %p282
      %p284 = pneg %p283
      // Predicated region
      $region33: #{tpu_custom_call.1} parent=5 // pred_check
        _
      $region34: #{tpu_custom_call.1} parent=5 // pred_check_branch
        %286 = sbr.rel (%p283) target = $region36
      $region35: #{tpu_custom_call.1} parent=5 // pred_region
        %s287 = ssub.s32 %s22, 1
        %s288 = sand.u32 %s77, 1
        %s289 = scalar_lea.sflag [#allocation5], %s288
        %s290 = sand.u32 %s77, 1
        %s291 = smul.addr %s290, 8
        %s292 = scalar_lea.vmem [#allocation4], %s291
        // Predicated region
        $region37: #{tpu_custom_call.1} parent=35 // pred_check
          %p293 = pneg %p90
        $region38: #{tpu_custom_call.1} parent=35 // pred_check_branch
          %295 = sbr.rel (%p293) target = $region40
        $region39: #{tpu_custom_call.1} parent=35 // pred_region
          %296 = dma.done %s289, 128
        $region40: #{tpu_custom_call.1} parent=35 // pred_fallthru
          _
        %p297 = scmp.lt.s32.totalorder %s31, 1
        %s298 = scalar_select %p297, %s31, 1
        %p299 = scmp.lt.s32.totalorder %s32, 0
        %s300 = scalar_select %p299, %s32, 0
        %s301 = smul.addr %s300, 2
        %s302 = smul.addr %s298, 2
        %s303 = sadd.s32 %s301, %s302
        %s304 = smul.addr %s303, 4
        %s305 = scalar_lea.vmem %s0, %s304
        %p306 = pneg %p62
        %p307 = pneg %p59
        %s308 = sand.u32 %s77, 1
        %s309 = scalar_lea.sflag [#allocation5], %s308
        %s310 = sand.u32 %s77, 1
        %s311 = smul.addr %s310, 8
        %s312 = scalar_lea.vmem [#allocation4], %s311
        %p313 = pneg %p90
        %p314 = pneg %p87
        %p315 = scmp.lt.s32.totalorder %s32, 0
        %s316 = scalar_select %p315, %s32, 0
        %s317 = smul.addr %s316, 4
        %s318 = scalar_lea.vmem %s2, %s317
        %p319 = pneg %p116
        %p320 = pneg %p113
        %p321 = pneg %p137
        %p322 = pneg %p134
        %p323 = pneg %p165
        %p324 = pneg %p162
        %s325 = sand.u32 %s152, 1
        %s326 = scalar_lea.sflag [#allocation6], %s325
        %s327 = sand.u32 %s152, 1
        %s328 = smul.addr %s327, 8
        %s329 = scalar_lea.vmem [#allocation7], %s328
        %p330 = pneg %p193
        %p331 = pneg %p190
        %s332 = sand.u32 %s27, 1
        %s333 = scalar_lea.sflag [#allocation9], %s332
        %s334 = sand.u32 %s180, 1
        %s335 = smul.addr %s334, 8
        %s336 = scalar_lea.vmem [#allocation8], %s335
        %p337 = pneg %p219
        %p338 = pneg %p216
        %s339 = sand.u32 %s27, 1
        %s340 = scalar_lea.sflag [#allocation9], %s339
        %s341 = sand.u32 %s206, 1
        %s342 = scalar_lea.vmem [#allocation10], %s341
        %p343 = scmp.lt.s32.totalorder %s31, 1
        %s344 = scalar_select %p343, %s31, 1
        %p345 = scmp.lt.s32.totalorder %s32, 0
        %s346 = scalar_select %p345, %s32, 0
        %s347 = smul.addr %s346, 2
        %s348 = smul.addr %s344, 2
        %s349 = sadd.s32 %s347, %s348
        %s350 = smul.addr %s349, 4
        %s351 = scalar_lea.vmem %s0, %s350
        %p352 = scmp.lt.s32.totalorder %s32, 0
        %s353 = scalar_select %p352, %s32, 0
        %s354 = smul.addr %s353, 4
        %s355 = scalar_lea.vmem %s2, %s354
        %p357 = scmp.eq.s32.totalorder %s32, 0
        %v358 = vld [vmem:[%s351] sm:$0xff]
        %v359 = vld [vmem:[%s292] sm:$0xff]
        %v361 = vcombine.high %v358, %v358
        %vm363 = vcmask 1043456
        %v364 = vsel %vm363, %v358, 0.0
        %v365 = vsel %vm363, %v361, 0.0
        %v366 = vadd.f32 %v364, %v365
        %367 = vadd.xlane.f32.xlu0 %v366
        %v368 = vpop.xlane.xlu0 %367
        %v369 = vmul.f32 %v368, 0.00390625
        %v372 = vunpack.c.l.s4 839922192
        %v373 = vunpack.c.0.s8 %v372
        %v374 = vlaneseq
        %v375 = vshrl.u32 %v374, 7
        %v376 = vsub.s32 %v373, %v375
        %v377 = vrot.slane %v369, %v376
        %v379 = vsub.f32 %v358, %v377
        %v380 = vmul.f32 %v379, %v379
        %v382 = vcombine.high %v380, %v380
        %v384 = vsel %vm363, %v380, 0.0
        %v385 = vsel %vm363, %v382, 0.0
        %v386 = vadd.f32 %v384, %v385
        %387 = vadd.xlane.f32.xlu0 %v386
        %v388 = vpop.xlane.xlu0 %387
        %v389 = vmul.f32 %v388, 0.003921569
        %v390 = vadd.f32 %v389, 1e-05
        %v391 = vrsqrt.pop %v390
        %v392 = vmul.f32 %v390, %v391
        %vm393 = vcmp.eq.f32.partialorder %v390, inf
        %v394 = vsel %vm393, %v390, %v392
        %vm395 = vcmp.eq.f32.partialorder %v390, 0.0
        %v396 = vand.u32 %v390, 2147483648
        %v397 = vsel %vm395, %v396, %v394
        %v398 = vrcp.pop %v397
        %v399 = vmul.f32 1.0, %v398
        %v402 = vunpack.c.l.s4 839922192
        %v403 = vunpack.c.0.s8 %v402
        %v404 = vlaneseq
        %v405 = vshrl.u32 %v404, 7
        %v406 = vsub.s32 %v403, %v405
        %v407 = vrot.slane %v399, %v406
        %v409 = vmul.f32 %v379, %v407
        %v411 = vcombine.high %v359, %v359
        %v413 = vsel %vm363, %v359, 0.0
        %v414 = vsel %vm363, %v411, 0.0
        %v415 = vadd.f32 %v413, %v414
        %416 = vadd.xlane.f32.xlu0 %v415
        %v417 = vpop.xlane.xlu0 %416
        %v418 = vmul.f32 %v417, 0.00390625
        %v421 = vunpack.c.l.s4 839922192
        %v422 = vunpack.c.0.s8 %v421
        %v423 = vlaneseq
        %v424 = vshrl.u32 %v423, 7
        %v425 = vsub.s32 %v422, %v424
        %v426 = vrot.slane %v418, %v425
        %v428 = vsub.f32 %v359, %v426
        %v429 = vmul.f32 %v428, %v428
        %v431 = vcombine.high %v429, %v429
        %v433 = vsel %vm363, %v429, 0.0
        %v434 = vsel %vm363, %v431, 0.0
        %v435 = vadd.f32 %v433, %v434
        %436 = vadd.xlane.f32.xlu0 %v435
        %v437 = vpop.xlane.xlu0 %436
        %v438 = vmul.f32 %v437, 0.003921569
        %v439 = vadd.f32 %v438, 1e-05
        %v440 = vrsqrt.pop %v439
        %v441 = vmul.f32 %v439, %v440
        %vm442 = vcmp.eq.f32.partialorder %v439, inf
        %v443 = vsel %vm442, %v439, %v441
        %vm444 = vcmp.eq.f32.partialorder %v439, 0.0
        %v445 = vand.u32 %v439, 2147483648
        %v446 = vsel %vm444, %v445, %v443
        %v447 = vrcp.pop %v446
        %v448 = vmul.f32 1.0, %v447
        %v451 = vunpack.c.l.s4 839922192
        %v452 = vunpack.c.0.s8 %v451
        %v453 = vlaneseq
        %v454 = vshrl.u32 %v453, 7
        %v455 = vsub.s32 %v452, %v454
        %v456 = vrot.slane %v448, %v455
        %v458 = vmul.f32 %v428, %v456
        %v459 = vadd.f32 %v369, 1e-05
        %v460 = vrsqrt.pop %v459
        %v461 = vmul.f32 %v459, %v460
        %vm462 = vcmp.eq.f32.partialorder %v459, inf
        %v463 = vsel %vm462, %v459, %v461
        %vm464 = vcmp.eq.f32.partialorder %v459, 0.0
        %v465 = vand.u32 %v459, 2147483648
        %v466 = vsel %vm464, %v465, %v463
        %v469 = vunpack.c.l.s4 839922192
        %v470 = vunpack.c.0.s8 %v469
        %v471 = vlaneseq
        %v472 = vshrl.u32 %v471, 7
        %v473 = vsub.s32 %v470, %v472
        %v474 = vrot.slane %v466, %v473
        %v476 = vmul.f32 %v458, %v474
        %v479 = vunpack.c.l.s4 839922192
        %v480 = vunpack.c.0.s8 %v479
        %v481 = vlaneseq
        %v482 = vshrl.u32 %v481, 7
        %v483 = vsub.s32 %v480, %v482
        %v484 = vrot.slane %v389, %v483
        %v486 = vadd.f32 %v476, %v484
        %487 = vst [vmem:[%s329] sm:$0xff] %v486
        %v488 = vadd.f32 %v418, 1e-05
        %v489 = vrsqrt.pop %v488
        %v490 = vmul.f32 %v488, %v489
        %vm491 = vcmp.eq.f32.partialorder %v488, inf
        %v492 = vsel %vm491, %v488, %v490
        %vm493 = vcmp.eq.f32.partialorder %v488, 0.0
        %v494 = vand.u32 %v488, 2147483648
        %v495 = vsel %vm493, %v494, %v492
        %v498 = vunpack.c.l.s4 839922192
        %v499 = vunpack.c.0.s8 %v498
        %v500 = vlaneseq
        %v501 = vshrl.u32 %v500, 7
        %v502 = vsub.s32 %v499, %v501
        %v503 = vrot.slane %v495, %v502
        %v505 = vmul.f32 %v409, %v503
        %v508 = vunpack.c.l.s4 839922192
        %v509 = vunpack.c.0.s8 %v508
        %v510 = vlaneseq
        %v511 = vshrl.u32 %v510, 7
        %v512 = vsub.s32 %v509, %v511
        %v513 = vrot.slane %v438, %v512
        %v515 = vadd.f32 %v505, %v513
        %516 = vst [vmem:[%s336] sm:$0xff] %v515
        %v517 = vmul.f32 %v409, %v409
        %v518 = vmul.f32 %v517, %v409
        %v520 = vcombine.high %v518, %v518
        %v522 = vsel %vm363, %v518, 0.0
        %v523 = vsel %vm363, %v520, 0.0
        %v524 = vadd.f32 %v522, %v523
        %525 = vadd.xlane.f32.xlu0 %v524
        %v526 = vpop.xlane.xlu0 %525
        %v527 = vrot.slane %v526, 4
        %v528 = vadd.f32 %v526, %v527
        %v529 = vrot.slane %v528, 2
        %v530 = vadd.f32 %v528, %v529
        %v531 = vrot.slane %v530, 1
        %v532 = vadd.f32 %v530, %v531
        %s533 = vtos %v532
        %v534 = vmul.f32 %v517, %v517
        %v536 = vcombine.high %v534, %v534
        %v538 = vsel %vm363, %v534, 0.0
        %v539 = vsel %vm363, %v536, 0.0
        %v540 = vadd.f32 %v538, %v539
        %541 = vadd.xlane.f32.xlu0 %v540
        %v542 = vpop.xlane.xlu0 %541
        %v543 = vrot.slane %v542, 4
        %v544 = vadd.f32 %v542, %v543
        %v545 = vrot.slane %v544, 2
        %v546 = vadd.f32 %v544, %v545
        %v547 = vrot.slane %v546, 1
        %v548 = vadd.f32 %v546, %v547
        %s549 = vtos %v548
        %v550 = vmul.f32 %v458, %v458
        %v551 = vmul.f32 %v550, %v458
        %v553 = vcombine.high %v551, %v551
        %v555 = vsel %vm363, %v551, 0.0
        %v556 = vsel %vm363, %v553, 0.0
        %v557 = vadd.f32 %v555, %v556
        %558 = vadd.xlane.f32.xlu0 %v557
        %v559 = vpop.xlane.xlu0 %558
        %v560 = vrot.slane %v559, 4
        %v561 = vadd.f32 %v559, %v560
        %v562 = vrot.slane %v561, 2
        %v563 = vadd.f32 %v561, %v562
        %v564 = vrot.slane %v563, 1
        %v565 = vadd.f32 %v563, %v564
        %s566 = vtos %v565
        %v567 = vmul.f32 %v550, %v550
        %v569 = vcombine.high %v567, %v567
        %v571 = vsel %vm363, %v567, 0.0
        %v572 = vsel %vm363, %v569, 0.0
        %v573 = vadd.f32 %v571, %v572
        %574 = vadd.xlane.f32.xlu0 %v573
        %v575 = vpop.xlane.xlu0 %574
        %v576 = vrot.slane %v575, 4
        %v577 = vadd.f32 %v575, %v576
        %v578 = vrot.slane %v577, 2
        %v579 = vadd.f32 %v577, %v578
        %v580 = vrot.slane %v579, 1
        %v581 = vadd.f32 %v579, %v580
        %s582 = vtos %v581
        // Predicated region
        $region41: #{tpu_custom_call.1} parent=35 // pred_check
          %p583 = pneg %p357
        $region42: #{tpu_custom_call.1} parent=35 // pred_check_branch
          %585 = sbr.rel (%p583) target = $region44
        $region43: #{tpu_custom_call.1} parent=35 // pred_region
          %vm586 = vcmask 57344
          %587 = vst.msk [vmem:[%s342] sm:$0x1] %vm586, 0.0
          %588 = vst [vmem:[#allocation2] sm:$0xff] 0.0
          %589 = vst [vmem:[#allocation2 + $0x8] sm:$0xff] 0.0
          %590 = vst [vmem:[#allocation2 + $0x10] sm:$0xff] 0.0
          %591 = vst [vmem:[#allocation2 + $0x18] sm:$0xff] 0.0
          %592 = vst [vmem:[#allocation2 + $0x20] sm:$0xff] 0.0
          %593 = vst [vmem:[#allocation2 + $0x28] sm:$0xff] 0.0
          %594 = vst [vmem:[#allocation2 + $0x30] sm:$0xff] 0.0
          %595 = vst [vmem:[#allocation2 + $0x38] sm:$0xff] 0.0
          %596 = vst [vmem:[#allocation3] sm:$0xff] 0.0
          %597 = vst [vmem:[#allocation3 + $0x8] sm:$0xff] 0.0
          %598 = vst [vmem:[#allocation3 + $0x10] sm:$0xff] 0.0
          %599 = vst [vmem:[#allocation3 + $0x18] sm:$0xff] 0.0
          %600 = vst [vmem:[#allocation3 + $0x20] sm:$0xff] 0.0
          %601 = vst [vmem:[#allocation3 + $0x28] sm:$0xff] 0.0
          %602 = vst [vmem:[#allocation3 + $0x30] sm:$0xff] 0.0
          %603 = vst [vmem:[#allocation3 + $0x38] sm:$0xff] 0.0
        $region44: #{tpu_custom_call.1} parent=35 // pred_fallthru
          _
        %v604 = vlaneseq
        %v605 = vand.u32 %v604, 127
        %v606 = vld [vmem:[%s342] sm:$0x1]
        %vm607 = vcmp.eq.s32.totalorder %v605, 0
        %v608 = vstv %s533
        %v609 = vsel %vm607, %v608, 0.0
        %vm610 = vcmp.eq.s32.totalorder %v605, 1
        %v611 = vstv %s549
        %v612 = vsel %vm610, %v611, 0.0
        %v613 = vadd.f32 %v609, %v612
        %vm614 = vcmp.eq.s32.totalorder %v605, 2
        %v615 = vstv %s566
        %v616 = vsel %vm614, %v615, 0.0
        %v617 = vadd.f32 %v613, %v616
        %vm618 = vcmp.eq.s32.totalorder %v605, 3
        %v619 = vstv %s582
        %v620 = vsel %vm618, %v619, 0.0
        %v621 = vadd.f32 %v617, %v620
        %v622 = vadd.f32 %v606, %v621
        %vm623 = vcmask 57344
        %624 = vst.msk [vmem:[%s342] sm:$0x1] %vm623, %v622
        %v625 = vld [vmem:[%s355] sm:$0xf]
        %v626 = vld [vmem:[%s355 + $0x4] sm:$0xf]
        %v627 = vld [vmem:[%s355 + $0x8] sm:$0xf]
        %v628 = vld [vmem:[%s355 + $0xc] sm:$0xf]
        %v629 = vld [vmem:[#allocation2] sm:$0xff]
        %v630 = vld [vmem:[#allocation2 + $0x8] sm:$0xff]
        %v631 = vld [vmem:[#allocation2 + $0x10] sm:$0xff]
        %v632 = vld [vmem:[#allocation2 + $0x18] sm:$0xff]
        %v633 = vld [vmem:[#allocation2 + $0x20] sm:$0xff]
        %v634 = vld [vmem:[#allocation2 + $0x28] sm:$0xff]
        %v635 = vld [vmem:[#allocation2 + $0x30] sm:$0xff]
        %v636 = vld [vmem:[#allocation2 + $0x38] sm:$0xff]
        %v638 = vcombine.high %v409, %v409
        %v640 = vpack.c.bf16 %v409, %v409
        %v641 = vpack.c.bf16 %v638, %v638
        %v646 = vunpack.c.l.b16 %v625
        %v647 = vunpack.c.l.b16 %v626
        %v648 = vunpack.c.l.b16 %v627
        %v649 = vunpack.c.l.b16 %v628
        %v650 = vpack.c.b16 %v647, %v646
        %v651 = vpack.c.b16 %v649, %v648
        %vm652 = vcmask 31744
        %v654 = vsel %vm652, %v650, 0
        %v657 = vsel %vm652, %v651, 0
        %vm659 = vcmask 1041408
        %v661 = vsel %vm659, %v640, 0
        %v664 = vsel %vm659, %v641, 0
        %666 = vmatprep.subr.bf16.mxu0 0
        %667 = vmatpush1.bf16.msra.mxu0 0
        %668 = vmatprep.subr.bf16.mxu0 0
        %669 = vmatpush1.bf16.msra.mxu0 0
        %670 = vmatprep.subr.bf16.mxu0 0
        %671 = vmatpush1.bf16.msra.mxu0 0
        %672 = vmatprep.subr.bf16.mxu0 0
        %673 = vmatpush1.bf16.msra.mxu0 0
        %674 = vmatprep.subr.bf16.mxu0 0
        %675 = vmatpush1.bf16.msra.mxu0 0
        %676 = vmatprep.subr.bf16.mxu0 0
        %677 = vmatpush1.bf16.msra.mxu0 0
        %678 = vmatprep.subr.bf16.mxu0 0
        %679 = vmatpush1.bf16.msra.mxu0 0
        %680 = vmatprep.subr.bf16.mxu0 %v664
        %681 = vmatpush1.bf16.msra.mxu0 %v661
        %682 = vmatprep.subr.bf16.mxu0 0
        %683 = vmatpush2.bf16.msra.mxu0 0
        %684 = vmatprep.subr.bf16.mxu0 0
        %685 = vmatpush2.bf16.msra.mxu0 0
        %686 = vmatprep.subr.bf16.mxu0 0
        %687 = vmatpush2.bf16.msra.mxu0 0
        %688 = vmatprep.subr.bf16.mxu0 0
        %689 = vmatpush2.bf16.msra.mxu0 0
        %690 = vmatprep.subr.bf16.mxu0 0
        %691 = vmatpush2.bf16.msra.mxu0 0
        %692 = vmatprep.subr.bf16.mxu0 0
        %693 = vmatpush2.bf16.msra.mxu0 0
        %694 = vmatprep.subr.bf16.mxu0 0
        %695 = vmatpush2.bf16.msra.mxu0 0
        %696 = vmatprep.subr.bf16.mxu0 0
        %697 = vmatpush2.bf16.msra.mxu0 0
        %698 = vmatprep.mubr.bf16.mxu0 0
        %699 = vmatmul.mubr.bf16.gmra.mxu0 %v654
        %v700 = vpop.f32.mrf.mxu0
        %v701 = vadd.f32 0.0, %v700
        %v702 = vpop.f32.mrf.mxu0
        %v703 = vadd.f32 0.0, %v702
        %v704 = vpop.f32.mrf.mxu0
        %v705 = vadd.f32 0.0, %v704
        %v706 = vpop.f32.mrf.mxu0
        %v707 = vadd.f32 0.0, %v706
        %708 = vmatprep.mubr.bf16.mxu0 0
        %709 = vmatmul.mubr.bf16.gmra.mxu0 %v657
        %v710 = vpop.f32.mrf.mxu0
        %v711 = vadd.f32 0.0, %v710
        %v712 = vpop.f32.mrf.mxu0
        %v713 = vadd.f32 0.0, %v712
        %v714 = vpop.f32.mrf.mxu0
        %v715 = vadd.f32 0.0, %v714
        %v716 = vpop.f32.mrf.mxu0
        %v717 = vadd.f32 0.0, %v716
        %718 = vdwg.mxu0
        %v719 = vadd.f32 %v629, %v701
        %v720 = vadd.f32 %v630, %v703
        %v721 = vadd.f32 %v631, %v705
        %v722 = vadd.f32 %v632, %v707
        %v723 = vadd.f32 %v633, %v711
        %v724 = vadd.f32 %v634, %v713
        %v725 = vadd.f32 %v635, %v715
        %v726 = vadd.f32 %v636, %v717
        %727 = vst [vmem:[#allocation2] sm:$0xff] %v719
        %728 = vst [vmem:[#allocation2 + $0x8] sm:$0xff] %v720
        %729 = vst [vmem:[#allocation2 + $0x10] sm:$0xff] %v721
        %730 = vst [vmem:[#allocation2 + $0x18] sm:$0xff] %v722
        %731 = vst [vmem:[#allocation2 + $0x20] sm:$0xff] %v723
        %732 = vst [vmem:[#allocation2 + $0x28] sm:$0xff] %v724
        %733 = vst [vmem:[#allocation2 + $0x30] sm:$0xff] %v725
        %734 = vst [vmem:[#allocation2 + $0x38] sm:$0xff] %v726
        %v735 = vld [vmem:[#allocation3] sm:$0xff]
        %v736 = vld [vmem:[#allocation3 + $0x8] sm:$0xff]
        %v737 = vld [vmem:[#allocation3 + $0x10] sm:$0xff]
        %v738 = vld [vmem:[#allocation3 + $0x18] sm:$0xff]
        %v739 = vld [vmem:[#allocation3 + $0x20] sm:$0xff]
        %v740 = vld [vmem:[#allocation3 + $0x28] sm:$0xff]
        %v741 = vld [vmem:[#allocation3 + $0x30] sm:$0xff]
        %v742 = vld [vmem:[#allocation3 + $0x38] sm:$0xff]
        %v744 = vcombine.high %v458, %v458
        %v746 = vpack.c.bf16 %v458, %v458
        %v747 = vpack.c.bf16 %v744, %v744
        %v749 = vsel %vm659, %v746, 0
        %v752 = vsel %vm659, %v747, 0
        %754 = vmatprep.subr.bf16.mxu0 0
        %755 = vmatpush1.bf16.msra.mxu0 0
        %756 = vmatprep.subr.bf16.mxu0 0
        %757 = vmatpush1.bf16.msra.mxu0 0
        %758 = vmatprep.subr.bf16.mxu0 0
        %759 = vmatpush1.bf16.msra.mxu0 0
        %760 = vmatprep.subr.bf16.mxu0 0
        %761 = vmatpush1.bf16.msra.mxu0 0
        %762 = vmatprep.subr.bf16.mxu0 0
        %763 = vmatpush1.bf16.msra.mxu0 0
        %764 = vmatprep.subr.bf16.mxu0 0
        %765 = vmatpush1.bf16.msra.mxu0 0
        %766 = vmatprep.subr.bf16.mxu0 0
        %767 = vmatpush1.bf16.msra.mxu0 0
        %768 = vmatprep.subr.bf16.mxu0 %v752
        %769 = vmatpush1.bf16.msra.mxu0 %v749
        %770 = vmatprep.subr.bf16.mxu0 0
        %771 = vmatpush2.bf16.msra.mxu0 0
        %772 = vmatprep.subr.bf16.mxu0 0
        %773 = vmatpush2.bf16.msra.mxu0 0
        %774 = vmatprep.subr.bf16.mxu0 0
        %775 = vmatpush2.bf16.msra.mxu0 0
        %776 = vmatprep.subr.bf16.mxu0 0
        %777 = vmatpush2.bf16.msra.mxu0 0
        %778 = vmatprep.subr.bf16.mxu0 0
        %779 = vmatpush2.bf16.msra.mxu0 0
        %780 = vmatprep.subr.bf16.mxu0 0
        %781 = vmatpush2.bf16.msra.mxu0 0
        %782 = vmatprep.subr.bf16.mxu0 0
        %783 = vmatpush2.bf16.msra.mxu0 0
        %784 = vmatprep.subr.bf16.mxu0 0
        %785 = vmatpush2.bf16.msra.mxu0 0
        %786 = vmatprep.mubr.bf16.mxu0 0
        %787 = vmatmul.mubr.bf16.gmra.mxu0 %v654
        %v788 = vpop.f32.mrf.mxu0
        %v789 = vadd.f32 0.0, %v788
        %v790 = vpop.f32.mrf.mxu0
        %v791 = vadd.f32 0.0, %v790
        %v792 = vpop.f32.mrf.mxu0
        %v793 = vadd.f32 0.0, %v792
        %v794 = vpop.f32.mrf.mxu0
        %v795 = vadd.f32 0.0, %v794
        %796 = vmatprep.mubr.bf16.mxu0 0
        %797 = vmatmul.mubr.bf16.gmra.mxu0 %v657
        %v798 = vpop.f32.mrf.mxu0
        %v799 = vadd.f32 0.0, %v798
        %v800 = vpop.f32.mrf.mxu0
        %v801 = vadd.f32 0.0, %v800
        %v802 = vpop.f32.mrf.mxu0
        %v803 = vadd.f32 0.0, %v802
        %v804 = vpop.f32.mrf.mxu0
        %v805 = vadd.f32 0.0, %v804
        %806 = vdwg.mxu0
        %v807 = vadd.f32 %v735, %v789
        %v808 = vadd.f32 %v736, %v791
        %v809 = vadd.f32 %v737, %v793
        %v810 = vadd.f32 %v738, %v795
        %v811 = vadd.f32 %v739, %v799
        %v812 = vadd.f32 %v740, %v801
        %v813 = vadd.f32 %v741, %v803
        %v814 = vadd.f32 %v742, %v805
        %815 = vst [vmem:[#allocation3] sm:$0xff] %v807
        %816 = vst [vmem:[#allocation3 + $0x8] sm:$0xff] %v808
        %817 = vst [vmem:[#allocation3 + $0x10] sm:$0xff] %v809
        %818 = vst [vmem:[#allocation3 + $0x18] sm:$0xff] %v810
        %819 = vst [vmem:[#allocation3 + $0x20] sm:$0xff] %v811
        %820 = vst [vmem:[#allocation3 + $0x28] sm:$0xff] %v812
        %821 = vst [vmem:[#allocation3 + $0x30] sm:$0xff] %v813
        %822 = vst [vmem:[#allocation3 + $0x38] sm:$0xff] %v814
        // Predicated region
        $region45: #{tpu_custom_call.1} parent=35 // pred_check
          %p823 = pneg %p357
        $region46: #{tpu_custom_call.1} parent=35 // pred_check_branch
          %825 = sbr.rel (%p823) target = $region48
        $region47: #{tpu_custom_call.1} parent=35 // pred_region
          %v826 = vld [vmem:[%s3] sm:$0x1]
          %v827 = vld [vmem:[#allocation2] sm:$0xff]
          %v828 = vld [vmem:[#allocation2 + $0x8] sm:$0xff]
          %v829 = vld [vmem:[#allocation2 + $0x10] sm:$0xff]
          %v830 = vld [vmem:[#allocation2 + $0x18] sm:$0xff]
          %v831 = vld [vmem:[#allocation2 + $0x20] sm:$0xff]
          %v832 = vld [vmem:[#allocation2 + $0x28] sm:$0xff]
          %v833 = vld [vmem:[#allocation2 + $0x30] sm:$0xff]
          %v834 = vld [vmem:[#allocation2 + $0x38] sm:$0xff]
          %v835 = vmax.f32 %v827, 0.0
          %v836 = vmax.f32 %v828, 0.0
          %v837 = vmax.f32 %v829, 0.0
          %v838 = vmax.f32 %v830, 0.0
          %v839 = vmax.f32 %v831, 0.0
          %v840 = vmax.f32 %v832, 0.0
          %v841 = vmax.f32 %v833, 0.0
          %v842 = vmax.f32 %v834, 0.0
          %vm843 = vcmask 261120
          %v845 = vsel %vm843, %v826, 0
          %847 = vmatprep.subr.mxu0 0.0
          %848 = vmatpush1.msra.mxu0 0.0
          %849 = vmatprep.subr.mxu0 0.0
          %850 = vmatpush1.msra.mxu0 0.0
          %851 = vmatprep.subr.mxu0 0.0
          %852 = vmatpush1.msra.mxu0 0.0
          %853 = vmatprep.subr.mxu0 0.0
          %854 = vmatpush1.msra.mxu0 0.0
          %855 = vmatprep.subr.mxu0 0.0
          %856 = vmatpush1.msra.mxu0 0.0
          %857 = vmatprep.subr.mxu0 0.0
          %858 = vmatpush1.msra.mxu0 0.0
          %859 = vmatprep.subr.mxu0 0.0
          %860 = vmatpush1.msra.mxu0 0.0
          %861 = vmatprep.subr.mxu0 0.0
          %862 = vmatpush1.msra.mxu0 0.0
          %863 = vmatprep.subr.mxu0 0.0
          %864 = vmatpush1.msra.mxu0 0.0
          %865 = vmatprep.subr.mxu0 0.0
          %866 = vmatpush1.msra.mxu0 0.0
          %867 = vmatprep.subr.mxu0 0.0
          %868 = vmatpush1.msra.mxu0 0.0
          %869 = vmatprep.subr.mxu0 0.0
          %870 = vmatpush1.msra.mxu0 0.0
          %871 = vmatprep.subr.mxu0 %v842
          %872 = vmatpush1.msra.mxu0 %v841
          %873 = vmatprep.subr.mxu0 %v840
          %874 = vmatpush1.msra.mxu0 %v839
          %875 = vmatprep.subr.mxu0 %v838
          %876 = vmatpush1.msra.mxu0 %v837
          %877 = vmatprep.subr.mxu0 %v836
          %878 = vmatpush1.msra.mxu0 %v835
          %879 = vmatprep.subr.mxu0 0.0
          %880 = vmatpush2.msra.mxu0 0.0
          %881 = vmatprep.subr.mxu0 0.0
          %882 = vmatpush2.msra.mxu0 0.0
          %883 = vmatprep.subr.mxu0 0.0
          %884 = vmatpush2.msra.mxu0 0.0
          %885 = vmatprep.subr.mxu0 0.0
          %886 = vmatpush2.msra.mxu0 0.0
          %887 = vmatprep.subr.mxu0 0.0
          %888 = vmatpush2.msra.mxu0 0.0
          %889 = vmatprep.subr.mxu0 0.0
          %890 = vmatpush2.msra.mxu0 0.0
          %891 = vmatprep.subr.mxu0 0.0
          %892 = vmatpush2.msra.mxu0 0.0
          %893 = vmatprep.subr.mxu0 0.0
          %894 = vmatpush2.msra.mxu0 0.0
          %895 = vmatprep.subr.mxu0 0.0
          %896 = vmatpush2.msra.mxu0 0.0
          %897 = vmatprep.subr.mxu0 0.0
          %898 = vmatpush2.msra.mxu0 0.0
          %899 = vmatprep.subr.mxu0 0.0
          %900 = vmatpush2.msra.mxu0 0.0
          %901 = vmatprep.subr.mxu0 0.0
          %902 = vmatpush2.msra.mxu0 0.0
          %903 = vmatprep.subr.mxu0 0.0
          %904 = vmatpush2.msra.mxu0 0.0
          %905 = vmatprep.subr.mxu0 0.0
          %906 = vmatpush2.msra.mxu0 0.0
          %907 = vmatprep.subr.mxu0 0.0
          %908 = vmatpush2.msra.mxu0 0.0
          %909 = vmatprep.subr.mxu0 0.0
          %910 = vmatpush2.msra.mxu0 0.0
          %911 = vmatprep.mubr.f32.mxu0 0.0
          %912 = vmatmul.mubr.f32.gmra.mxu0 %v845
          %v913 = vpop.f32.mrf.mxu0
          %v914 = vadd.f32 0.0, %v913
          %v915 = vpop.f32.mrf.mxu0
          %v916 = vadd.f32 0.0, %v915
          %917 = vdwg.mxu0
          %v918 = vmul.f32 %v914, -1.0
          %v919 = vmul.f32 %v916, -1.0
          %v920 = vmax.f32 %v918, 0.0
          %v921 = vmax.f32 %v919, 0.0
          %v922 = vand.u32 2147483647, %v918
          %v923 = vand.u32 2147483647, %v919
          %v924 = vsub.f32 0.0, %v922
          %v925 = vsub.f32 0.0, %v923
          %v926 = vmul.f32 %v924, 1.442695
          %v927 = vpow.pop %v926
          %v928 = vmul.f32 %v925, 1.442695
          %v929 = vpow.pop %v928
          %v930 = vadd.f32 %v927, 1.0
          %v931 = vlog2.pop %v930
          %v932 = vmul.f32 %v931, 0.6931472
          %v933 = vmul.f32 -0.5, %v927
          %v934 = vadd.f32 %v933, 1.0
          %v935 = vmul.f32 %v934, %v927
          %v936 = vand.u32 2147483647, %v927
          %vm937 = vcmp.lt.f32.partialorder %v936, 0.0004427343
          %v938 = vsel %vm937, %v935, %v932
          %v939 = vadd.f32 %v929, 1.0
          %v940 = vlog2.pop %v939
          %v941 = vmul.f32 %v940, 0.6931472
          %v942 = vmul.f32 -0.5, %v929
          %v943 = vadd.f32 %v942, 1.0
          %v944 = vmul.f32 %v943, %v929
          %v945 = vand.u32 2147483647, %v929
          %vm946 = vcmp.lt.f32.partialorder %v945, 0.0004427343
          %v947 = vsel %vm946, %v944, %v941
          %v948 = vadd.f32 %v920, %v938
          %v949 = vadd.f32 %v921, %v947
          %vm950 = vcmask 1040384
          %v951 = vsel %vm950, %v948, 0.0
          %v952 = vsel %vm950, %v949, 0.0
          %v953 = vadd.f32 %v951, %v952
          %954 = vadd.xlane.f32.xlu0 %v953
          %v955 = vpop.xlane.xlu0 %954
          %v956 = vrot.slane %v955, 4
          %v957 = vadd.f32 %v955, %v956
          %v958 = vrot.slane %v957, 2
          %v959 = vadd.f32 %v957, %v958
          %v960 = vrot.slane %v959, 1
          %v961 = vadd.f32 %v959, %v960
          %s962 = vtos %v961
          %v963 = vld [vmem:[#allocation3] sm:$0xff]
          %v964 = vld [vmem:[#allocation3 + $0x8] sm:$0xff]
          %v965 = vld [vmem:[#allocation3 + $0x10] sm:$0xff]
          %v966 = vld [vmem:[#allocation3 + $0x18] sm:$0xff]
          %v967 = vld [vmem:[#allocation3 + $0x20] sm:$0xff]
          %v968 = vld [vmem:[#allocation3 + $0x28] sm:$0xff]
          %v969 = vld [vmem:[#allocation3 + $0x30] sm:$0xff]
          %v970 = vld [vmem:[#allocation3 + $0x38] sm:$0xff]
          %v971 = vmax.f32 %v963, 0.0
          %v972 = vmax.f32 %v964, 0.0
          %v973 = vmax.f32 %v965, 0.0
          %v974 = vmax.f32 %v966, 0.0
          %v975 = vmax.f32 %v967, 0.0
          %v976 = vmax.f32 %v968, 0.0
          %v977 = vmax.f32 %v969, 0.0
          %v978 = vmax.f32 %v970, 0.0
          %979 = vmatprep.subr.mxu0 0.0
          %980 = vmatpush1.msra.mxu0 0.0
          %981 = vmatprep.subr.mxu0 0.0
          %982 = vmatpush1.msra.mxu0 0.0
          %983 = vmatprep.subr.mxu0 0.0
          %984 = vmatpush1.msra.mxu0 0.0
          %985 = vmatprep.subr.mxu0 0.0
          %986 = vmatpush1.msra.mxu0 0.0
          %987 = vmatprep.subr.mxu0 0.0
          %988 = vmatpush1.msra.mxu0 0.0
          %989 = vmatprep.subr.mxu0 0.0
          %990 = vmatpush1.msra.mxu0 0.0
          %991 = vmatprep.subr.mxu0 0.0
          %992 = vmatpush1.msra.mxu0 0.0
          %993 = vmatprep.subr.mxu0 0.0
          %994 = vmatpush1.msra.mxu0 0.0
          %995 = vmatprep.subr.mxu0 0.0
          %996 = vmatpush1.msra.mxu0 0.0
          %997 = vmatprep.subr.mxu0 0.0
          %998 = vmatpush1.msra.mxu0 0.0
          %999 = vmatprep.subr.mxu0 0.0
          %1000 = vmatpush1.msra.mxu0 0.0
          %1001 = vmatprep.subr.mxu0 0.0
          %1002 = vmatpush1.msra.mxu0 0.0
          %1003 = vmatprep.subr.mxu0 %v978
          %1004 = vmatpush1.msra.mxu0 %v977
          %1005 = vmatprep.subr.mxu0 %v976
          %1006 = vmatpush1.msra.mxu0 %v975
          %1007 = vmatprep.subr.mxu0 %v974
          %1008 = vmatpush1.msra.mxu0 %v973
          %1009 = vmatprep.subr.mxu0 %v972
          %1010 = vmatpush1.msra.mxu0 %v971
          %1011 = vmatprep.subr.mxu0 0.0
          %1012 = vmatpush2.msra.mxu0 0.0
          %1013 = vmatprep.subr.mxu0 0.0
          %1014 = vmatpush2.msra.mxu0 0.0
          %1015 = vmatprep.subr.mxu0 0.0
          %1016 = vmatpush2.msra.mxu0 0.0
          %1017 = vmatprep.subr.mxu0 0.0
          %1018 = vmatpush2.msra.mxu0 0.0
          %1019 = vmatprep.subr.mxu0 0.0
          %1020 = vmatpush2.msra.mxu0 0.0
          %1021 = vmatprep.subr.mxu0 0.0
          %1022 = vmatpush2.msra.mxu0 0.0
          %1023 = vmatprep.subr.mxu0 0.0
          %1024 = vmatpush2.msra.mxu0 0.0
          %1025 = vmatprep.subr.mxu0 0.0
          %1026 = vmatpush2.msra.mxu0 0.0
          %1027 = vmatprep.subr.mxu0 0.0
          %1028 = vmatpush2.msra.mxu0 0.0
          %1029 = vmatprep.subr.mxu0 0.0
          %1030 = vmatpush2.msra.mxu0 0.0
          %1031 = vmatprep.subr.mxu0 0.0
          %1032 = vmatpush2.msra.mxu0 0.0
          %1033 = vmatprep.subr.mxu0 0.0
          %1034 = vmatpush2.msra.mxu0 0.0
          %1035 = vmatprep.subr.mxu0 0.0
          %1036 = vmatpush2.msra.mxu0 0.0
          %1037 = vmatprep.subr.mxu0 0.0
          %1038 = vmatpush2.msra.mxu0 0.0
          %1039 = vmatprep.subr.mxu0 0.0
          %1040 = vmatpush2.msra.mxu0 0.0
          %1041 = vmatprep.subr.mxu0 0.0
          %1042 = vmatpush2.msra.mxu0 0.0
          %1043 = vmatprep.mubr.f32.mxu0 0.0
          %1044 = vmatmul.mubr.f32.gmra.mxu0 %v845
          %v1045 = vpop.f32.mrf.mxu0
          %v1046 = vadd.f32 0.0, %v1045
          %v1047 = vpop.f32.mrf.mxu0
          %v1048 = vadd.f32 0.0, %v1047
          %1049 = vdwg.mxu0
          %v1050 = vmax.f32 %v1046, 0.0
          %v1051 = vmax.f32 %v1048, 0.0
          %v1052 = vand.u32 2147483647, %v1046
          %v1053 = vand.u32 2147483647, %v1048
          %v1054 = vsub.f32 0.0, %v1052
          %v1055 = vsub.f32 0.0, %v1053
          %v1056 = vmul.f32 %v1054, 1.442695
          %v1057 = vpow.pop %v1056
          %v1058 = vmul.f32 %v1055, 1.442695
          %v1059 = vpow.pop %v1058
          %v1060 = vadd.f32 %v1057, 1.0
          %v1061 = vlog2.pop %v1060
          %v1062 = vmul.f32 %v1061, 0.6931472
          %v1063 = vmul.f32 -0.5, %v1057
          %v1064 = vadd.f32 %v1063, 1.0
          %v1065 = vmul.f32 %v1064, %v1057
          %v1066 = vand.u32 2147483647, %v1057
          %vm1067 = vcmp.lt.f32.partialorder %v1066, 0.0004427343
          %v1068 = vsel %vm1067, %v1065, %v1062
          %v1069 = vadd.f32 %v1059, 1.0
          %v1070 = vlog2.pop %v1069
          %v1071 = vmul.f32 %v1070, 0.6931472
          %v1072 = vmul.f32 -0.5, %v1059
          %v1073 = vadd.f32 %v1072, 1.0
          %v1074 = vmul.f32 %v1073, %v1059
          %v1075 = vand.u32 2147483647, %v1059
          %vm1076 = vcmp.lt.f32.partialorder %v1075, 0.0004427343
          %v1077 = vsel %vm1076, %v1074, %v1071
          %v1078 = vadd.f32 %v1050, %v1068
          %v1079 = vadd.f32 %v1051, %v1077
          %v1080 = vsel %vm950, %v1078, 0.0
          %v1081 = vsel %vm950, %v1079, 0.0
          %v1082 = vadd.f32 %v1080, %v1081
          %1083 = vadd.xlane.f32.xlu0 %v1082
          %v1084 = vpop.xlane.xlu0 %1083
          %v1085 = vrot.slane %v1084, 4
          %v1086 = vadd.f32 %v1084, %v1085
          %v1087 = vrot.slane %v1086, 2
          %v1088 = vadd.f32 %v1086, %v1087
          %v1089 = vrot.slane %v1088, 1
          %v1090 = vadd.f32 %v1088, %v1089
          %s1091 = vtos %v1090
          %v1092 = vld [vmem:[%s342] sm:$0x1]
          %vm1093 = vcmp.eq.s32.totalorder %v605, 4
          %v1094 = vstv %s962
          %v1095 = vsel %vm1093, %v1094, 0.0
          %vm1096 = vcmp.eq.s32.totalorder %v605, 5
          %v1097 = vstv %s1091
          %v1098 = vsel %vm1096, %v1097, 0.0
          %v1099 = vadd.f32 %v1095, %v1098
          %v1100 = vadd.f32 %v1092, %v1099
          %1101 = vst.msk [vmem:[%s342] sm:$0x1] %vm623, %v1100
        $region48: #{tpu_custom_call.1} parent=35 // pred_fallthru
          _
        %s1102 = sand.u32 %s152, 1
        %s1103 = scalar_lea.sflag [#allocation6], %s1102
        %s1104 = sand.u32 %s152, 1
        %s1105 = smul.addr %s1104, 8
        %s1106 = scalar_lea.vmem [#allocation7], %s1105
        %s1107 = sand.u32 %s27, 1
        %s1108 = scalar_lea.sflag [#allocation9], %s1107
        %s1109 = sand.u32 %s180, 1
        %s1110 = smul.addr %s1109, 8
        %s1111 = scalar_lea.vmem [#allocation8], %s1110
        %s1112 = sand.u32 %s27, 1
        %s1113 = scalar_lea.sflag [#allocation9], %s1112
        %s1114 = sand.u32 %s206, 1
        %s1115 = scalar_lea.vmem [#allocation10], %s1114
        // Predicated region
        $region49: #{tpu_custom_call.1} parent=35 // pred_check
          %p1116 = pneg %p162
        $region50: #{tpu_custom_call.1} parent=35 // pred_check_branch
          %1118 = sbr.rel (%p1116) target = $region52
        $region51: #{tpu_custom_call.1} parent=35 // pred_region
          %s1120 = ssub.s32 128, 128
          %1121 = vsyncadd %s1103, %s1120
          %s1122 = smul.addr %s32, 2
          %s1123 = smul.addr %s31, 2
          %s1124 = sadd.s32 %s1122, %s1123
          %s1125 = smul.addr %s1124, 64
          %s1126 = scalar_lea.hbm %s4, %s1125
          %s1128 = sshll.u32 %s1106, 4
          %s1129 = int_to_ptr.vmem [resolvable:$true] %s1128
          %1131 = dma.vmem_to_hbm [thread:$0]  %s1129, 128, %s1126, %s1103
        $region52: #{tpu_custom_call.1} parent=35 // pred_fallthru
          _
        // Predicated region
        $region53: #{tpu_custom_call.1} parent=35 // pred_check
          %p1132 = pneg %p190
        $region54: #{tpu_custom_call.1} parent=35 // pred_check_branch
          %1134 = sbr.rel (%p1132) target = $region56
        $region55: #{tpu_custom_call.1} parent=35 // pred_region
          %s1136 = ssub.s32 128, 128
          %1137 = vsyncadd %s1108, %s1136
          %s1138 = smul.addr %s32, 2
          %s1139 = smul.addr %s31, 2
          %s1140 = sadd.s32 %s1138, %s1139
          %s1141 = smul.addr %s1140, 64
          %s1142 = scalar_lea.hbm %s5, %s1141
          %s1144 = sshll.u32 %s1111, 4
          %s1145 = int_to_ptr.vmem [resolvable:$true] %s1144
          %1147 = dma.vmem_to_hbm [thread:$0]  %s1145, 128, %s1142, %s1108
        $region56: #{tpu_custom_call.1} parent=35 // pred_fallthru
          _
        // Predicated region
        $region57: #{tpu_custom_call.1} parent=35 // pred_check
          %p1148 = pneg %p216
        $region58: #{tpu_custom_call.1} parent=35 // pred_check_branch
          %1150 = sbr.rel (%p1148) target = $region60
        $region59: #{tpu_custom_call.1} parent=35 // pred_region
          %s1152 = ssub.s32 16, 16
          %1153 = vsyncadd %s1113, %s1152
          %s1154 = smul.addr %s31, 16
          %s1155 = scalar_lea.hbm %s6, %s1154
          %s1157 = sshll.u32 %s1115, 4
          %s1158 = int_to_ptr.vmem [resolvable:$true] %s1157
          %1160 = dma.vmem_to_hbm [thread:$0]  %s1158, 16, %s1155, %s1113
        $region60: #{tpu_custom_call.1} parent=35 // pred_fallthru
          _
      $region36: #{tpu_custom_call.1} parent=5 // pred_fallthru
        _
      %p1161 = scmp.le.s32.totalorder 2, %s22
      // Predicated region
      $region61: #{tpu_custom_call.1} parent=5 // pred_check
        %p1162 = pneg %p1161
      $region62: #{tpu_custom_call.1} parent=5 // pred_check_branch
        %1164 = sbr.rel (%p1162) target = $region64
      $region63: #{tpu_custom_call.1} parent=5 // pred_region
        %s1165 = ssub.s32 %s22, 2
        // Predicated region
        $region65: #{tpu_custom_call.1} parent=63 // pred_check
          %p1166 = pneg %p168
        $region66: #{tpu_custom_call.1} parent=63 // pred_check_branch
          %1168 = sbr.rel (%p1166) target = $region68
        $region67: #{tpu_custom_call.1} parent=63 // pred_region
          %s1169 = sand.u32 %s153, 1
          %s1170 = scalar_lea.sflag [#allocation6], %s1169
          %s1171 = sand.u32 %s153, 1
          %s1172 = smul.addr %s1171, 8
          %s1173 = scalar_lea.vmem [#allocation7], %s1172
          %1174 = dma.done %s1170, 128
        $region68: #{tpu_custom_call.1} parent=63 // pred_fallthru
          _
        // Predicated region
        $region69: #{tpu_custom_call.1} parent=63 // pred_check
          %p1175 = pneg %p196
        $region70: #{tpu_custom_call.1} parent=63 // pred_check_branch
          %1177 = sbr.rel (%p1175) target = $region72
        $region71: #{tpu_custom_call.1} parent=63 // pred_region
          %s1178 = sand.u32 %s28, 1
          %s1179 = scalar_lea.sflag [#allocation9], %s1178
          %s1180 = sand.u32 %s181, 1
          %s1181 = smul.addr %s1180, 8
          %s1182 = scalar_lea.vmem [#allocation8], %s1181
          %1183 = dma.done %s1179, 128
        $region72: #{tpu_custom_call.1} parent=63 // pred_fallthru
          _
        // Predicated region
        $region73: #{tpu_custom_call.1} parent=63 // pred_check
          %p1184 = pneg %p222
        $region74: #{tpu_custom_call.1} parent=63 // pred_check_branch
          %1186 = sbr.rel (%p1184) target = $region76
        $region75: #{tpu_custom_call.1} parent=63 // pred_region
          %s1187 = sand.u32 %s28, 1
          %s1188 = scalar_lea.sflag [#allocation9], %s1187
          %s1189 = sand.u32 %s207, 1
          %s1190 = scalar_lea.vmem [#allocation10], %s1189
          %1191 = dma.done %s1188, 16
        $region76: #{tpu_custom_call.1} parent=63 // pred_fallthru
          _
      $region64: #{tpu_custom_call.1} parent=5 // pred_fallthru
        _
    $region6: #{tpu_custom_call.1} parent=1 // loop_footer
      %s26 = sadd.s32 1, %s22
    $region7: #{tpu_custom_call.1} parent=1 // loop_footer_branch
      %21 = sbr.rel target = $region3
    $region8: #{tpu_custom_call.1} parent=1 // loop_exit
      _
    %1192 = vsyncpa [#allocation5], 1
    %s1193 = scalar_lea.sflag [#allocation5], 1
    %1194 = vsyncpa %s1193, 1
    %1195 = vsyncpa [#allocation6], 1
    %s1196 = scalar_lea.sflag [#allocation6], 1
    %1197 = vsyncpa %s1196, 1
    %1198 = vsyncpa [#allocation9], 1
    %s1199 = scalar_lea.sflag [#allocation9], 1
    %1200 = vsyncpa %s1199, 1

</llo_original>
